<compile_context>
chip_gen: v6e
topology: v6e:2x2x1
jax: 0.10.0
libtpu: 0.0.40
codegen_flags: <defaults>
</compile_context>

<pallas_src>
import jax
import jax.numpy as jnp
from jax.experimental import pallas as pl
from jax.experimental.pallas import tpu as pltpu  # noqa: F401  (production tuning hooks)


# -------------------------- config (small, deterministic) --------------------------
NUM_FEATURES = 4      # args.num_features
HIDDEN_DIM   = 32     # args.hidden_dim
NUM_LAYERS   = 3      # args.num_layers
NUM_CLASSES  = 5      # args.num_classes
R, LEV       = 2, 2
SCALE        = (R - 1) * LEV + 1          # = 3
NUM_NODES    = 16                         # total nodes across the batch of graphs
BATCH_SIZE   = 2                          # graphs per batch (nodes 0..7 -> g0, 8..15 -> g1)
POOL_ROWS    = 8                          # per-scale pooled rows padded to one sublane tile
NEG_PAD      = -1e30                      # bias on unused logit lanes -> softmax-inert
OUT_LANES    = 128                        # lane-dense output slab width

# weight-slab row layout (every offset is a multiple of 8)
ROW_GCN_W = (0, HIDDEN_DIM, 2 * HIDDEN_DIM)                   # three [32,32] blocks
ROW_FC1   = NUM_LAYERS * HIDDEN_DIM                           # 96,  [288,32]
ROW_FC2   = ROW_FC1 + SCALE * NUM_LAYERS * HIDDEN_DIM         # 384, [32,32] (lanes>=16 zero)
ROW_FC3   = ROW_FC2 + HIDDEN_DIM                              # 416, [32,32] (rows>=16, lanes>=5 zero)
ROW_BIAS  = ROW_FC3 + HIDDEN_DIM                              # 448, [8,32]
SLAB_ROWS = ROW_BIAS + 8                                      # 456


def _vmem_spec(shape):
    # full-array block resident in VMEM (grid is empty -> index_map takes no args)
    return pl.BlockSpec(shape, lambda: (0,) * len(shape))


# ------------------------------- fused Pallas kernel -------------------------------
def fused_forward_kernel(apd_ref, x_ref, w_ref, o_ref):
    """apd: [N + SCALE*8, N]  rows 0:N = A_norm; rows N+s*8 : N+s*8+B = pool @ D_s (rest zero)
       x  : [N, H]            node features, lane-padded to HIDDEN_DIM with zeros
       w  : [SLAB_ROWS, H]    packed weights / biases (ROW_* layout above)
       o  : [8, 128]          lane/sublane-dense output slab; real data in [0:B, 0:NUM_CLASSES]
    """
    f32 = jnp.float32
    H = HIDDEN_DIM

    def mxu(u, v):
        return jnp.dot(u, v, preferred_element_type=f32)

    apd = apd_ref[...]                              # [N + SCALE*8, N]
    a   = apd[:NUM_NODES]                           # [N, N]
    pd  = apd[NUM_NODES:]                           # [SCALE*8, N]
    bias = w_ref[ROW_BIAS:ROW_BIAS + 8, :]          # [8, H]: b0,b1,b2,fc1_b,fc2_b,fc3_b,0,0

    ah  = mxu(a, x_ref[...])                        # A @ x  (padded x lanes are zero)
    acc = jnp.zeros((POOL_ROWS, H), f32)            # fc1 pre-activation, accumulated in-loop
    for l in range(NUM_LAYERS):                     # static, tiny -> unrolled
        w_l = w_ref[ROW_GCN_W[l]:ROW_GCN_W[l] + H, :]
        h = jnp.maximum(mxu(ah, w_l) + bias[l:l + 1, :], 0.0)       # relu((A@h) @ W + b)
        if l + 1 < NUM_LAYERS:
            stacked = mxu(apd, h)                   # one matmul: [A@h ; pool@D_s@h]
            ah = stacked[:NUM_NODES]                # feeds next layer
            pooled = stacked[NUM_NODES:]            # [SCALE*8, H], scale-major 8-row blocks
        else:
            pooled = mxu(pd, h)                     # last layer: A@h not needed
        # fc1 folded into the layer loop: acc += pooled_{l,s} @ fc1_w block (no lane concat)
        for s in range(SCALE):
            r0 = ROW_FC1 + (l * SCALE + s) * H
            acc = acc + mxu(pooled[s * POOL_ROWS:(s + 1) * POOL_ROWS, :],
                            w_ref[r0:r0 + H, :])

    # fc head: relu(fc1) -> relu(fc2) -> log_softmax(fc3); dropout is identity in eval mode
    z = jnp.maximum(acc + bias[3:4, :], 0.0)                                        # fc1
    z = jnp.maximum(mxu(z, w_ref[ROW_FC2:ROW_FC2 + H, :]) + bias[4:5, :], 0.0)      # fc2
    z = mxu(z, w_ref[ROW_FC3:ROW_FC3 + H, :]) + bias[5:6, :]                        # fc3
    m = jnp.max(z, axis=-1, keepdims=True)          # padded logit lanes sit at -1e30 -> inert
    lse = m + jnp.log(jnp.sum(jnp.exp(z - m), axis=-1, keepdims=True))
    res = z - lse                                   # [8, H]
    o_ref[...] = jnp.concatenate(                   # single dense [8,128] store
        [res, jnp.zeros((POOL_ROWS, OUT_LANES - H), f32)], axis=-1)


# ------------------------------- pallas_call wrapper --------------------------------
def model_hierarchical_forward(wslab, apd, x):
    x_pad = jnp.pad(x, ((0, 0), (0, HIDDEN_DIM - x.shape[1])))
    out_pad = pl.pallas_call(
        fused_forward_kernel,
        out_shape=jax.ShapeDtypeStruct((POOL_ROWS, OUT_LANES), jnp.float32),
        in_specs=[_vmem_spec(apd.shape), _vmem_spec(x_pad.shape), _vmem_spec(wslab.shape)],
        out_specs=_vmem_spec((POOL_ROWS, OUT_LANES)),
    )(apd, x_pad, wslab)
    return out_pad[:BATCH_SIZE, :NUM_CLASSES]       # slice padded slab back to [B, C]


# ------------------------------- host-side glue (plain JAX, built once) --------------
def build_gcn_norm(edge_index, num_nodes):
    """Symmetric-normalized adjacency with self loops: D^-1/2 (A+I) D^-1/2."""
    a = jnp.zeros((num_nodes, num_nodes), jnp.float32)
    a = a.at[edge_index[0], edge_index[1]].set(1.0)
    a = a.at[edge_index[1], edge_index[0]].set(1.0)
    idx = jnp.arange(num_nodes)
    a = a.at[idx, idx].set(1.0)               # idempotent self-loop (never 2.0)
    deg = jnp.sum(a, axis=1)
    dinv = 1.0 / jnp.sqrt(deg)
    return a * dinv[:, None] * dinv[None, :]


def build_multiscale_dense(d_values, d_index, num_nodes):
    """Densify the sparse framelet transforms: (values, [scale, row, col]) -> [SCALE,N,N]."""
    d = jnp.zeros((SCALE, num_nodes, num_nodes), jnp.float32)
    return d.at[d_index[0], d_index[1], d_index[2]].set(d_values)


def build_apd(a_norm, d_dense, pool_mat):
    """Stack A_norm and the pooled framelet transforms into one operand.
    Each scale's pool@D_s rows sit at the top of their own 8-row sublane block."""
    pd = jnp.einsum('bn,snm->sbm', pool_mat, d_dense)                     # [SCALE, B, N]
    pd = jnp.pad(pd, ((0, 0), (0, POOL_ROWS - pool_mat.shape[0]), (0, 0)))
    pd = pd.reshape(SCALE * POOL_ROWS, a_norm.shape[0])                   # [SCALE*8, N]
    return jnp.concatenate([a_norm, pd], axis=0).astype(jnp.float32)     # [N + SCALE*8, N]


def build_weight_slab(params):
    """Pack every weight / bias into one [SLAB_ROWS, HIDDEN_DIM] f32 slab (single DMA)."""
    H = HIDDEN_DIM

    def pad2(a, rows, cols, fill=0.0):
        return jnp.pad(a, ((0, rows - a.shape[0]), (0, cols - a.shape[1])),
                       constant_values=fill)

    bias = jnp.concatenate([
        params["gcn_b"][0], params["gcn_b"][1], params["gcn_b"][2],
        params["fc1_b"],
        pad2(params["fc2_b"], 1, H),
        pad2(params["fc3_b"], 1, H, fill=NEG_PAD),   # -1e30 on unused logit lanes
        jnp.zeros((2, H), jnp.float32),
    ], axis=0)                                       # [8, H]
    slab = jnp.concatenate([
        pad2(params["gcn_w"][0], H, H),              # [4,32]  -> [32,32] (zero rows)
        params["gcn_w"][1],                          # [32,32]
        params["gcn_w"][2],                          # [32,32]
        params["fc1_w"],                             # [288,32]
        pad2(params["fc2_w"], H, H),                 # [32,16] -> [32,32] (zero lanes)
        pad2(params["fc3_w"], H, H),                 # [16,5]  -> [32,32] (zero rows/lanes)
        bias,
    ], axis=0).astype(jnp.float32)
    assert slab.shape == (SLAB_ROWS, H)
    return slab


# ------------------------------- reference (pure JAX) --------------------------------
def reference_forward(params, x, a_norm, d_dense, pool_mat):
    h = x
    xs = []
    for l in range(NUM_LAYERS):
        h = jnp.maximum(a_norm @ (h @ params["gcn_w"][l]) + params["gcn_b"][l], 0.0)
        pooled = jnp.concatenate([pool_mat @ (d_dense[s] @ h) for s in range(SCALE)], axis=-1)
        xs.append(pooled)
    xc = jnp.concatenate(xs, axis=-1)
    z = jnp.maximum(xc @ params["fc1_w"] + params["fc1_b"], 0.0)
    z = jnp.maximum(z @ params["fc2_w"] + params["fc2_b"], 0.0)
    z = z @ params["fc3_w"] + params["fc3_b"]
    return jax.nn.log_softmax(z, axis=-1)


# ------------------------------- params ----------------------------------------------
def init_params(key):
    ks = jax.random.split(key, 16)

    def lin(k, fin, fout):
        s = 1.0 / jnp.sqrt(jnp.float32(fin))
        return (jax.random.uniform(k, (fin, fout), jnp.float32, -s, s),
                jnp.zeros((1, fout), jnp.float32))

    gcn_w, gcn_b = [], []
    w, b = lin(ks[0], NUM_FEATURES, HIDDEN_DIM)
    gcn_w.append(w); gcn_b.append(b)
    for i in range(1, NUM_LAYERS):
        w, b = lin(ks[i], HIDDEN_DIM, HIDDEN_DIM)
        gcn_w.append(w); gcn_b.append(b)
    fc1_w, fc1_b = lin(ks[8],  SCALE * HIDDEN_DIM * NUM_LAYERS, HIDDEN_DIM)
    fc2_w, fc2_b = lin(ks[9],  HIDDEN_DIM, HIDDEN_DIM // 2)
    fc3_w, fc3_b = lin(ks[10], HIDDEN_DIM // 2, NUM_CLASSES)
    return dict(gcn_w=gcn_w, gcn_b=gcn_b,
                fc1_w=fc1_w, fc1_b=fc1_b,
                fc2_w=fc2_w, fc2_b=fc2_b,
                fc3_w=fc3_w, fc3_b=fc3_b)


if __name__ == "__main__":
    key = jax.random.PRNGKey(0)
    k_x, k_d, _ = jax.random.split(key, 3)

    # node features [N, F]
    x = jax.random.normal(k_x, (NUM_NODES, NUM_FEATURES), jnp.float32)

    # two 8-node ring graphs: edge_index [2, E]
    edges = []
    for g in range(BATCH_SIZE):
        base = g * (NUM_NODES // BATCH_SIZE)
        n_g = NUM_NODES // BATCH_SIZE
        for i in range(n_g):
            edges.append((base + i, base + (i + 1) % n_g))
    edge_index = jnp.asarray(edges, jnp.int32).T
    batch = jnp.repeat(jnp.arange(BATCH_SIZE, dtype=jnp.int32), NUM_NODES // BATCH_SIZE)

    # sparse framelet transform (d, d_index): one entry per (scale, node) diagonal-ish band
    rows = jnp.tile(jnp.arange(NUM_NODES, dtype=jnp.int32), SCALE)
    cols = (rows + jnp.repeat(jnp.arange(SCALE, dtype=jnp.int32), NUM_NODES)) % NUM_NODES
    scales = jnp.repeat(jnp.arange(SCALE, dtype=jnp.int32), NUM_NODES)
    d_index = jnp.stack([scales, rows, cols])                    # [3, nnz]
    d_values = jax.random.normal(k_d, (SCALE * NUM_NODES,), jnp.float32)

    # dense precompute (host-side glue, built once)
    a_norm = build_gcn_norm(edge_index, NUM_NODES)                      # [N, N]
    d_dense = build_multiscale_dense(d_values, d_index, NUM_NODES)      # [SCALE, N, N]
    pool_mat = (batch[None, :] == jnp.arange(BATCH_SIZE)[:, None]).astype(jnp.float32)  # [B, N]

    params = init_params(key)
    apd = build_apd(a_norm, d_dense, pool_mat)                          # [N + SCALE*8, N]
    wslab = build_weight_slab(params)                                   # [456, 32]

    out = model_hierarchical_forward(wslab, apd, x)
    out = jax.block_until_ready(out)

    # correctness checks (on the sliced [B, C] block only)
    assert out.shape == (BATCH_SIZE, NUM_CLASSES)
    assert jnp.allclose(jnp.sum(jnp.exp(out), axis=-1), 1.0, atol=1e-4)
    ref = reference_forward(params, x, a_norm, d_dense, pool_mat)
    assert jnp.allclose(out, ref, atol=1e-3, rtol=1e-3), (out, ref)
    print("KERNEL_OK")
</pallas_src>

<mosaic_0001>
module attributes {stable_mosaic.version = 11 : i64} {
  func.func @fused_forward_kernel(%arg0: memref<40x16xf32, #tpu.memory_space<vmem>>, %arg1: memref<16x32xf32, #tpu.memory_space<vmem>>, %arg2: memref<456x32xf32, #tpu.memory_space<vmem>>, %arg3: memref<8x128xf32, #tpu.memory_space<vmem>>) attributes {dimension_semantics = [], scalar_prefetch = 0 : i64, scratch_operands = 0 : i64, tpu.core_type = #tpu.core_type<tc>} {
    %c0 = arith.constant 0 : index
    %c0_0 = arith.constant 0 : index
    %0 = vector.load %arg0[%c0, %c0_0] : memref<40x16xf32, #tpu.memory_space<vmem>>, vector<40x16xf32>
    %1 = vector.extract_strided_slice %0 {offsets = [0, 0], sizes = [16, 16], strides = [1, 1]} : vector<40x16xf32> to vector<16x16xf32>
    %2 = vector.extract_strided_slice %0 {offsets = [16, 0], sizes = [24, 16], strides = [1, 1]} : vector<40x16xf32> to vector<24x16xf32>
    %c448 = arith.constant 448 : index
    %c0_1 = arith.constant 0 : index
    %3 = vector.load %arg2[%c448, %c0_1] : memref<456x32xf32, #tpu.memory_space<vmem>>, vector<8x32xf32>
    %c0_2 = arith.constant 0 : index
    %c0_3 = arith.constant 0 : index
    %4 = vector.load %arg1[%c0_2, %c0_3] : memref<16x32xf32, #tpu.memory_space<vmem>>, vector<16x32xf32>
    %cst = arith.constant dense<0.000000e+00> : vector<16x32xf32>
    %5 = tpu.matmul %1, %4, %cst {dimension_numbers = #tpu.dot_dimension_numbers<[1], [0], [0], [1], [0, 0, 1, 1], [], []>} : vector<16x16xf32>, vector<16x32xf32>, vector<16x32xf32> -> vector<16x32xf32>
    %cst_4 = arith.constant 0.000000e+00 : f32
    %6 = vector.broadcast %cst_4 : f32 to vector<8x32xf32>
    %c0_5 = arith.constant 0 : index
    %c0_6 = arith.constant 0 : index
    %7 = vector.load %arg2[%c0_5, %c0_6] : memref<456x32xf32, #tpu.memory_space<vmem>>, vector<32x32xf32>
    %cst_7 = arith.constant dense<0.000000e+00> : vector<16x32xf32>
    %8 = tpu.matmul %5, %7, %cst_7 {dimension_numbers = #tpu.dot_dimension_numbers<[1], [0], [0], [1], [0, 0, 1, 1], [], []>} : vector<16x32xf32>, vector<32x32xf32>, vector<16x32xf32> -> vector<16x32xf32>
    %9 = vector.extract_strided_slice %3 {offsets = [0, 0], sizes = [1, 32], strides = [1, 1]} : vector<8x32xf32> to vector<1x32xf32>
    %10 = vector.broadcast %9 : vector<1x32xf32> to vector<16x32xf32>
    %11 = arith.addf %8, %10 : vector<16x32xf32>
    %cst_8 = arith.constant 0.000000e+00 : f32
    %12 = vector.broadcast %cst_8 : f32 to vector<16x32xf32>
    %13 = arith.maximumf %11, %12 : vector<16x32xf32>
    %cst_9 = arith.constant dense<0.000000e+00> : vector<40x32xf32>
    %14 = tpu.matmul %0, %13, %cst_9 {dimension_numbers = #tpu.dot_dimension_numbers<[1], [0], [0], [1], [0, 0, 1, 1], [], []>} : vector<40x16xf32>, vector<16x32xf32>, vector<40x32xf32> -> vector<40x32xf32>
    %15 = vector.extract_strided_slice %14 {offsets = [0, 0], sizes = [16, 32], strides = [1, 1]} : vector<40x32xf32> to vector<16x32xf32>
    %16 = vector.extract_strided_slice %14 {offsets = [16, 0], sizes = [24, 32], strides = [1, 1]} : vector<40x32xf32> to vector<24x32xf32>
    %17 = vector.extract_strided_slice %16 {offsets = [0, 0], sizes = [8, 32], strides = [1, 1]} : vector<24x32xf32> to vector<8x32xf32>
    %c96 = arith.constant 96 : index
    %c0_10 = arith.constant 0 : index
    %18 = vector.load %arg2[%c96, %c0_10] : memref<456x32xf32, #tpu.memory_space<vmem>>, vector<32x32xf32>
    %cst_11 = arith.constant dense<0.000000e+00> : vector<8x32xf32>
    %19 = tpu.matmul %17, %18, %cst_11 {dimension_numbers = #tpu.dot_dimension_numbers<[1], [0], [0], [1], [0, 0, 1, 1], [], []>} : vector<8x32xf32>, vector<32x32xf32>, vector<8x32xf32> -> vector<8x32xf32>
    %20 = arith.addf %6, %19 : vector<8x32xf32>
    %21 = vector.extract_strided_slice %16 {offsets = [8, 0], sizes = [8, 32], strides = [1, 1]} : vector<24x32xf32> to vector<8x32xf32>
    %c128 = arith.constant 128 : index
    %c0_12 = arith.constant 0 : index
    %22 = vector.load %arg2[%c128, %c0_12] : memref<456x32xf32, #tpu.memory_space<vmem>>, vector<32x32xf32>
    %cst_13 = arith.constant dense<0.000000e+00> : vector<8x32xf32>
    %23 = tpu.matmul %21, %22, %cst_13 {dimension_numbers = #tpu.dot_dimension_numbers<[1], [0], [0], [1], [0, 0, 1, 1], [], []>} : vector<8x32xf32>, vector<32x32xf32>, vector<8x32xf32> -> vector<8x32xf32>
    %24 = arith.addf %20, %23 : vector<8x32xf32>
    %25 = vector.extract_strided_slice %16 {offsets = [16, 0], sizes = [8, 32], strides = [1, 1]} : vector<24x32xf32> to vector<8x32xf32>
    %c160 = arith.constant 160 : index
    %c0_14 = arith.constant 0 : index
    %26 = vector.load %arg2[%c160, %c0_14] : memref<456x32xf32, #tpu.memory_space<vmem>>, vector<32x32xf32>
    %cst_15 = arith.constant dense<0.000000e+00> : vector<8x32xf32>
    %27 = tpu.matmul %25, %26, %cst_15 {dimension_numbers = #tpu.dot_dimension_numbers<[1], [0], [0], [1], [0, 0, 1, 1], [], []>} : vector<8x32xf32>, vector<32x32xf32>, vector<8x32xf32> -> vector<8x32xf32>
    %28 = arith.addf %24, %27 : vector<8x32xf32>
    %c32 = arith.constant 32 : index
    %c0_16 = arith.constant 0 : index
    %29 = vector.load %arg2[%c32, %c0_16] : memref<456x32xf32, #tpu.memory_space<vmem>>, vector<32x32xf32>
    %cst_17 = arith.constant dense<0.000000e+00> : vector<16x32xf32>
    %30 = tpu.matmul %15, %29, %cst_17 {dimension_numbers = #tpu.dot_dimension_numbers<[1], [0], [0], [1], [0, 0, 1, 1], [], []>} : vector<16x32xf32>, vector<32x32xf32>, vector<16x32xf32> -> vector<16x32xf32>
    %31 = vector.extract_strided_slice %3 {offsets = [1, 0], sizes = [1, 32], strides = [1, 1]} : vector<8x32xf32> to vector<1x32xf32>
    %32 = vector.broadcast %31 : vector<1x32xf32> to vector<16x32xf32>
    %33 = arith.addf %30, %32 : vector<16x32xf32>
    %cst_18 = arith.constant 0.000000e+00 : f32
    %34 = vector.broadcast %cst_18 : f32 to vector<16x32xf32>
    %35 = arith.maximumf %33, %34 : vector<16x32xf32>
    %cst_19 = arith.constant dense<0.000000e+00> : vector<40x32xf32>
    %36 = tpu.matmul %0, %35, %cst_19 {dimension_numbers = #tpu.dot_dimension_numbers<[1], [0], [0], [1], [0, 0, 1, 1], [], []>} : vector<40x16xf32>, vector<16x32xf32>, vector<40x32xf32> -> vector<40x32xf32>
    %37 = vector.extract_strided_slice %36 {offsets = [0, 0], sizes = [16, 32], strides = [1, 1]} : vector<40x32xf32> to vector<16x32xf32>
    %38 = vector.extract_strided_slice %36 {offsets = [16, 0], sizes = [24, 32], strides = [1, 1]} : vector<40x32xf32> to vector<24x32xf32>
    %39 = vector.extract_strided_slice %38 {offsets = [0, 0], sizes = [8, 32], strides = [1, 1]} : vector<24x32xf32> to vector<8x32xf32>
    %c192 = arith.constant 192 : index
    %c0_20 = arith.constant 0 : index
    %40 = vector.load %arg2[%c192, %c0_20] : memref<456x32xf32, #tpu.memory_space<vmem>>, vector<32x32xf32>
    %cst_21 = arith.constant dense<0.000000e+00> : vector<8x32xf32>
    %41 = tpu.matmul %39, %40, %cst_21 {dimension_numbers = #tpu.dot_dimension_numbers<[1], [0], [0], [1], [0, 0, 1, 1], [], []>} : vector<8x32xf32>, vector<32x32xf32>, vector<8x32xf32> -> vector<8x32xf32>
    %42 = arith.addf %28, %41 : vector<8x32xf32>
    %43 = vector.extract_strided_slice %38 {offsets = [8, 0], sizes = [8, 32], strides = [1, 1]} : vector<24x32xf32> to vector<8x32xf32>
    %c224 = arith.constant 224 : index
    %c0_22 = arith.constant 0 : index
    %44 = vector.load %arg2[%c224, %c0_22] : memref<456x32xf32, #tpu.memory_space<vmem>>, vector<32x32xf32>
    %cst_23 = arith.constant dense<0.000000e+00> : vector<8x32xf32>
    %45 = tpu.matmul %43, %44, %cst_23 {dimension_numbers = #tpu.dot_dimension_numbers<[1], [0], [0], [1], [0, 0, 1, 1], [], []>} : vector<8x32xf32>, vector<32x32xf32>, vector<8x32xf32> -> vector<8x32xf32>
    %46 = arith.addf %42, %45 : vector<8x32xf32>
    %47 = vector.extract_strided_slice %38 {offsets = [16, 0], sizes = [8, 32], strides = [1, 1]} : vector<24x32xf32> to vector<8x32xf32>
    %c256 = arith.constant 256 : index
    %c0_24 = arith.constant 0 : index
    %48 = vector.load %arg2[%c256, %c0_24] : memref<456x32xf32, #tpu.memory_space<vmem>>, vector<32x32xf32>
    %cst_25 = arith.constant dense<0.000000e+00> : vector<8x32xf32>
    %49 = tpu.matmul %47, %48, %cst_25 {dimension_numbers = #tpu.dot_dimension_numbers<[1], [0], [0], [1], [0, 0, 1, 1], [], []>} : vector<8x32xf32>, vector<32x32xf32>, vector<8x32xf32> -> vector<8x32xf32>
    %50 = arith.addf %46, %49 : vector<8x32xf32>
    %c64 = arith.constant 64 : index
    %c0_26 = arith.constant 0 : index
    %51 = vector.load %arg2[%c64, %c0_26] : memref<456x32xf32, #tpu.memory_space<vmem>>, vector<32x32xf32>
    %cst_27 = arith.constant dense<0.000000e+00> : vector<16x32xf32>
    %52 = tpu.matmul %37, %51, %cst_27 {dimension_numbers = #tpu.dot_dimension_numbers<[1], [0], [0], [1], [0, 0, 1, 1], [], []>} : vector<16x32xf32>, vector<32x32xf32>, vector<16x32xf32> -> vector<16x32xf32>
    %53 = vector.extract_strided_slice %3 {offsets = [2, 0], sizes = [1, 32], strides = [1, 1]} : vector<8x32xf32> to vector<1x32xf32>
    %54 = vector.broadcast %53 : vector<1x32xf32> to vector<16x32xf32>
    %55 = arith.addf %52, %54 : vector<16x32xf32>
    %cst_28 = arith.constant 0.000000e+00 : f32
    %56 = vector.broadcast %cst_28 : f32 to vector<16x32xf32>
    %57 = arith.maximumf %55, %56 : vector<16x32xf32>
    %cst_29 = arith.constant dense<0.000000e+00> : vector<24x32xf32>
    %58 = tpu.matmul %2, %57, %cst_29 {dimension_numbers = #tpu.dot_dimension_numbers<[1], [0], [0], [1], [0, 0, 1, 1], [], []>} : vector<24x16xf32>, vector<16x32xf32>, vector<24x32xf32> -> vector<24x32xf32>
    %59 = vector.extract_strided_slice %58 {offsets = [0, 0], sizes = [8, 32], strides = [1, 1]} : vector<24x32xf32> to vector<8x32xf32>
    %c288 = arith.constant 288 : index
    %c0_30 = arith.constant 0 : index
    %60 = vector.load %arg2[%c288, %c0_30] : memref<456x32xf32, #tpu.memory_space<vmem>>, vector<32x32xf32>
    %cst_31 = arith.constant dense<0.000000e+00> : vector<8x32xf32>
    %61 = tpu.matmul %59, %60, %cst_31 {dimension_numbers = #tpu.dot_dimension_numbers<[1], [0], [0], [1], [0, 0, 1, 1], [], []>} : vector<8x32xf32>, vector<32x32xf32>, vector<8x32xf32> -> vector<8x32xf32>
    %62 = arith.addf %50, %61 : vector<8x32xf32>
    %63 = vector.extract_strided_slice %58 {offsets = [8, 0], sizes = [8, 32], strides = [1, 1]} : vector<24x32xf32> to vector<8x32xf32>
    %c320 = arith.constant 320 : index
    %c0_32 = arith.constant 0 : index
    %64 = vector.load %arg2[%c320, %c0_32] : memref<456x32xf32, #tpu.memory_space<vmem>>, vector<32x32xf32>
    %cst_33 = arith.constant dense<0.000000e+00> : vector<8x32xf32>
    %65 = tpu.matmul %63, %64, %cst_33 {dimension_numbers = #tpu.dot_dimension_numbers<[1], [0], [0], [1], [0, 0, 1, 1], [], []>} : vector<8x32xf32>, vector<32x32xf32>, vector<8x32xf32> -> vector<8x32xf32>
    %66 = arith.addf %62, %65 : vector<8x32xf32>
    %67 = vector.extract_strided_slice %58 {offsets = [16, 0], sizes = [8, 32], strides = [1, 1]} : vector<24x32xf32> to vector<8x32xf32>
    %c352 = arith.constant 352 : index
    %c0_34 = arith.constant 0 : index
    %68 = vector.load %arg2[%c352, %c0_34] : memref<456x32xf32, #tpu.memory_space<vmem>>, vector<32x32xf32>
    %cst_35 = arith.constant dense<0.000000e+00> : vector<8x32xf32>
    %69 = tpu.matmul %67, %68, %cst_35 {dimension_numbers = #tpu.dot_dimension_numbers<[1], [0], [0], [1], [0, 0, 1, 1], [], []>} : vector<8x32xf32>, vector<32x32xf32>, vector<8x32xf32> -> vector<8x32xf32>
    %70 = arith.addf %66, %69 : vector<8x32xf32>
    %71 = vector.extract_strided_slice %3 {offsets = [3, 0], sizes = [1, 32], strides = [1, 1]} : vector<8x32xf32> to vector<1x32xf32>
    %72 = vector.broadcast %71 : vector<1x32xf32> to vector<8x32xf32>
    %73 = arith.addf %70, %72 : vector<8x32xf32>
    %cst_36 = arith.constant 0.000000e+00 : f32
    %74 = vector.broadcast %cst_36 : f32 to vector<8x32xf32>
    %75 = arith.maximumf %73, %74 : vector<8x32xf32>
    %c384 = arith.constant 384 : index
    %c0_37 = arith.constant 0 : index
    %76 = vector.load %arg2[%c384, %c0_37] : memref<456x32xf32, #tpu.memory_space<vmem>>, vector<32x32xf32>
    %cst_38 = arith.constant dense<0.000000e+00> : vector<8x32xf32>
    %77 = tpu.matmul %75, %76, %cst_38 {dimension_numbers = #tpu.dot_dimension_numbers<[1], [0], [0], [1], [0, 0, 1, 1], [], []>} : vector<8x32xf32>, vector<32x32xf32>, vector<8x32xf32> -> vector<8x32xf32>
    %78 = vector.extract_strided_slice %3 {offsets = [4, 0], sizes = [1, 32], strides = [1, 1]} : vector<8x32xf32> to vector<1x32xf32>
    %79 = vector.broadcast %78 : vector<1x32xf32> to vector<8x32xf32>
    %80 = arith.addf %77, %79 : vector<8x32xf32>
    %cst_39 = arith.constant 0.000000e+00 : f32
    %81 = vector.broadcast %cst_39 : f32 to vector<8x32xf32>
    %82 = arith.maximumf %80, %81 : vector<8x32xf32>
    %c416 = arith.constant 416 : index
    %c0_40 = arith.constant 0 : index
    %83 = vector.load %arg2[%c416, %c0_40] : memref<456x32xf32, #tpu.memory_space<vmem>>, vector<32x32xf32>
    %cst_41 = arith.constant dense<0.000000e+00> : vector<8x32xf32>
    %84 = tpu.matmul %82, %83, %cst_41 {dimension_numbers = #tpu.dot_dimension_numbers<[1], [0], [0], [1], [0, 0, 1, 1], [], []>} : vector<8x32xf32>, vector<32x32xf32>, vector<8x32xf32> -> vector<8x32xf32>
    %85 = vector.extract_strided_slice %3 {offsets = [5, 0], sizes = [1, 32], strides = [1, 1]} : vector<8x32xf32> to vector<1x32xf32>
    %86 = vector.broadcast %85 : vector<1x32xf32> to vector<8x32xf32>
    %87 = arith.addf %84, %86 : vector<8x32xf32>
    %cst_42 = arith.constant dense<0xFF800000> : vector<8xf32>
    %88 = vector.multi_reduction <maximumf>, %87, %cst_42 [1] : vector<8x32xf32> to vector<8xf32>
    %89 = vector.shape_cast %88 : vector<8xf32> to vector<8x1xf32>
    %90 = vector.broadcast %89 : vector<8x1xf32> to vector<8x32xf32>
    %91 = arith.subf %87, %90 : vector<8x32xf32>
    %92 = math.exp %91 : vector<8x32xf32>
    %cst_43 = arith.constant dense<0.000000e+00> : vector<8xf32>
    %93 = vector.multi_reduction <add>, %92, %cst_43 [1] : vector<8x32xf32> to vector<8xf32>
    %94 = vector.shape_cast %93 : vector<8xf32> to vector<8x1xf32>
    %95 = math.log %94 : vector<8x1xf32>
    %96 = arith.addf %89, %95 : vector<8x1xf32>
    %97 = vector.broadcast %96 : vector<8x1xf32> to vector<8x32xf32>
    %98 = arith.subf %87, %97 : vector<8x32xf32>
    %cst_44 = arith.constant 0.000000e+00 : f32
    %99 = vector.broadcast %cst_44 : f32 to vector<8x96xf32>
    %100 = tpu.concatenate %98, %99 in 1 : vector<8x32xf32>, vector<8x96xf32> -> vector<8x128xf32>
    %c0_45 = arith.constant 0 : index
    %c0_46 = arith.constant 0 : index
    %101 = vector.load %arg3[%c0_45, %c0_46] : memref<8x128xf32, #tpu.memory_space<vmem>>, vector<8x128xf32>
    tpu.vector_store %arg3[%c0_45, %c0_46], %100 {strides = array<i32>} : memref<8x128xf32, #tpu.memory_space<vmem>>, vector<8x128xf32>,
    return
  }
}

</mosaic_0001>

<llo_original>
// kernel: tpu_custom_call.1
$region0: #{tpu_custom_call.1}
  #allocation0 [shape = 'u32[]', space=smem, size = 0x4, offset = 0x4, fixed_abs, tag = 'smem constant byte address 0x4 - core index']
  #allocation1 [shape = 'u32[144,128]{1,0:T(1,128)}', space=vmem, size = 0x12000, scoped, tag = 'internal scratch']
  %s0 = inlined_call_operand.vmem [shape: f32[40,16], index: 0, kind: input, shape index: {}]
  %s1 = inlined_call_operand.vmem [shape: f32[16,32], index: 1, kind: input, shape index: {}]
  %s2 = inlined_call_operand.vmem [shape: f32[456,32], index: 2, kind: input, shape index: {}]
  %s3 = inlined_call_operand.hbm [shape: f32[8,128], index: 3, kind: output, shape index: {}]
  %s4 = sld [smem:[#allocation0]]
  $region22: #{tpu_custom_call.1} parent=0
    _
  %s6 = ssub.s32 1, %s4
  %s7 = scalar_select 0, %s6, %s4
  $region1: #{tpu_custom_call.1} parent=0
    #allocation2 [shape = 'u8[4096]{0}', space=vmem, size = 0x1000, scoped, tag = 'output window, operand 0, single buffered']
    #allocation3 [shape = 's32[1]{0}', space=sflag, size = 0x4, scoped, tag = 'scoped memory for tpu_custom_call.1']
    %8 = vsyncpa [#allocation3], 0
    // Predicated region
    $region2: #{tpu_custom_call.1} parent=1 // pred_check
      _
    $region3: #{tpu_custom_call.1} parent=1 // pred_check_branch
      %10 = sbr.rel (0) target = $region5
    $region4: #{tpu_custom_call.1} parent=1 // pred_region
      _
    $region5: #{tpu_custom_call.1} parent=1 // pred_fallthru
      _
    // Predicated region
    $region6: #{tpu_custom_call.1} parent=1 // pred_check
      _
    $region7: #{tpu_custom_call.1} parent=1 // pred_check_branch
      %12 = sbr.rel (0) target = $region9
    $region8: #{tpu_custom_call.1} parent=1 // pred_region
      _
    $region9: #{tpu_custom_call.1} parent=1 // pred_fallthru
      _
    // Predicated region
    $region10: #{tpu_custom_call.1} parent=1 // pred_check
      _
    $region11: #{tpu_custom_call.1} parent=1 // pred_check_branch
      %14 = sbr.rel (0) target = $region13
    $region12: #{tpu_custom_call.1} parent=1 // pred_region
      _
    $region13: #{tpu_custom_call.1} parent=1 // pred_fallthru
      _
    %v15 = vld [vmem:[%s0] sm:$0xff]
    %v16 = vld [vmem:[%s0 + $0x8] sm:$0xff]
    %v17 = vld [vmem:[%s0 + $0x10] sm:$0xff]
    %v18 = vld [vmem:[%s0 + $0x18] sm:$0xff]
    %v19 = vld [vmem:[%s0 + $0x20] sm:$0xff]
    %v20 = vld [vmem:[%s2 + $0x1c0] sm:$0xff]
    %v21 = vld [vmem:[%s1] sm:$0xff]
    %v22 = vld [vmem:[%s1 + $0x8] sm:$0xff]
    %vm23 = vcmask 130048
    %v25 = vsel %vm23, %v15, 0
    %v28 = vsel %vm23, %v16, 0
    %30 = vmatprep.subr.mxu0 0.0
    %31 = vmatpush1.msra.mxu0 0.0
    %32 = vmatprep.subr.mxu0 0.0
    %33 = vmatpush1.msra.mxu0 0.0
    %34 = vmatprep.subr.mxu0 0.0
    %35 = vmatpush1.msra.mxu0 0.0
    %36 = vmatprep.subr.mxu0 0.0
    %37 = vmatpush1.msra.mxu0 0.0
    %38 = vmatprep.subr.mxu0 0.0
    %39 = vmatpush1.msra.mxu0 0.0
    %40 = vmatprep.subr.mxu0 0.0
    %41 = vmatpush1.msra.mxu0 0.0
    %42 = vmatprep.subr.mxu0 0.0
    %43 = vmatpush1.msra.mxu0 0.0
    %44 = vmatprep.subr.mxu0 0.0
    %45 = vmatpush1.msra.mxu0 0.0
    %46 = vmatprep.subr.mxu0 0.0
    %47 = vmatpush1.msra.mxu0 0.0
    %48 = vmatprep.subr.mxu0 0.0
    %49 = vmatpush1.msra.mxu0 0.0
    %50 = vmatprep.subr.mxu0 0.0
    %51 = vmatpush1.msra.mxu0 0.0
    %52 = vmatprep.subr.mxu0 0.0
    %53 = vmatpush1.msra.mxu0 0.0
    %54 = vmatprep.subr.mxu0 0.0
    %55 = vmatpush1.msra.mxu0 0.0
    %56 = vmatprep.subr.mxu0 0.0
    %57 = vmatpush1.msra.mxu0 0.0
    %58 = vmatprep.subr.mxu0 0.0
    %59 = vmatpush1.msra.mxu0 %v22
    %60 = vmatprep.subr.mxu0 0.0
    %61 = vmatpush1.msra.mxu0 %v21
    %62 = vmatprep.subr.mxu0 0.0
    %63 = vmatpush2.msra.mxu0 0.0
    %64 = vmatprep.subr.mxu0 0.0
    %65 = vmatpush2.msra.mxu0 0.0
    %66 = vmatprep.subr.mxu0 0.0
    %67 = vmatpush2.msra.mxu0 0.0
    %68 = vmatprep.subr.mxu0 0.0
    %69 = vmatpush2.msra.mxu0 0.0
    %70 = vmatprep.subr.mxu0 0.0
    %71 = vmatpush2.msra.mxu0 0.0
    %72 = vmatprep.subr.mxu0 0.0
    %73 = vmatpush2.msra.mxu0 0.0
    %74 = vmatprep.subr.mxu0 0.0
    %75 = vmatpush2.msra.mxu0 0.0
    %76 = vmatprep.subr.mxu0 0.0
    %77 = vmatpush2.msra.mxu0 0.0
    %78 = vmatprep.subr.mxu0 0.0
    %79 = vmatpush2.msra.mxu0 0.0
    %80 = vmatprep.subr.mxu0 0.0
    %81 = vmatpush2.msra.mxu0 0.0
    %82 = vmatprep.subr.mxu0 0.0
    %83 = vmatpush2.msra.mxu0 0.0
    %84 = vmatprep.subr.mxu0 0.0
    %85 = vmatpush2.msra.mxu0 0.0
    %86 = vmatprep.subr.mxu0 0.0
    %87 = vmatpush2.msra.mxu0 0.0
    %88 = vmatprep.subr.mxu0 0.0
    %89 = vmatpush2.msra.mxu0 0.0
    %90 = vmatprep.subr.mxu0 0.0
    %91 = vmatpush2.msra.mxu0 0.0
    %92 = vmatprep.subr.mxu0 0.0
    %93 = vmatpush2.msra.mxu0 0.0
    %94 = vmatprep.mubr.f32.mxu0 0.0
    %95 = vmatmul.mubr.f32.gmra.mxu0 %v25
    %v96 = vpop.f32.mrf.mxu0
    %v97 = vadd.f32 0.0, %v96
    %v98 = vpop.f32.mrf.mxu0
    %99 = vmatprep.mubr.f32.mxu0 0.0
    %100 = vmatmul.mubr.f32.gmra.mxu0 %v28
    %v101 = vpop.f32.mrf.mxu0
    %v102 = vadd.f32 0.0, %v101
    %v103 = vpop.f32.mrf.mxu0
    %104 = vdwg.mxu0
    %v105 = vld [vmem:[%s2] sm:$0xff]
    %v106 = vld [vmem:[%s2 + $0x8] sm:$0xff]
    %v107 = vld [vmem:[%s2 + $0x10] sm:$0xff]
    %v108 = vld [vmem:[%s2 + $0x18] sm:$0xff]
    %v109 = vlaneseq
    %v110 = vshrl.u32 %v109, 7
    %v111 = vsub.s32 0, %v110
    %v112 = vrot.slane %v20, %v111
    %vm113 = vcmask 261120
    %v115 = vsel %vm113, %v97, 0
    %v118 = vsel %vm113, %v102, 0
    %120 = vmatprep.subr.mxu0 0.0
    %121 = vmatpush1.msra.mxu0 0.0
    %122 = vmatprep.subr.mxu0 0.0
    %123 = vmatpush1.msra.mxu0 0.0
    %124 = vmatprep.subr.mxu0 0.0
    %125 = vmatpush1.msra.mxu0 0.0
    %126 = vmatprep.subr.mxu0 0.0
    %127 = vmatpush1.msra.mxu0 0.0
    %128 = vmatprep.subr.mxu0 0.0
    %129 = vmatpush1.msra.mxu0 0.0
    %130 = vmatprep.subr.mxu0 0.0
    %131 = vmatpush1.msra.mxu0 0.0
    %132 = vmatprep.subr.mxu0 0.0
    %133 = vmatpush1.msra.mxu0 0.0
    %134 = vmatprep.subr.mxu0 0.0
    %135 = vmatpush1.msra.mxu0 0.0
    %136 = vmatprep.subr.mxu0 0.0
    %137 = vmatpush1.msra.mxu0 0.0
    %138 = vmatprep.subr.mxu0 0.0
    %139 = vmatpush1.msra.mxu0 0.0
    %140 = vmatprep.subr.mxu0 0.0
    %141 = vmatpush1.msra.mxu0 0.0
    %142 = vmatprep.subr.mxu0 0.0
    %143 = vmatpush1.msra.mxu0 0.0
    %144 = vmatprep.subr.mxu0 0.0
    %145 = vmatpush1.msra.mxu0 %v108
    %146 = vmatprep.subr.mxu0 0.0
    %147 = vmatpush1.msra.mxu0 %v107
    %148 = vmatprep.subr.mxu0 0.0
    %149 = vmatpush1.msra.mxu0 %v106
    %150 = vmatprep.subr.mxu0 0.0
    %151 = vmatpush1.msra.mxu0 %v105
    %152 = vmatprep.subr.mxu0 0.0
    %153 = vmatpush2.msra.mxu0 0.0
    %154 = vmatprep.subr.mxu0 0.0
    %155 = vmatpush2.msra.mxu0 0.0
    %156 = vmatprep.subr.mxu0 0.0
    %157 = vmatpush2.msra.mxu0 0.0
    %158 = vmatprep.subr.mxu0 0.0
    %159 = vmatpush2.msra.mxu0 0.0
    %160 = vmatprep.subr.mxu0 0.0
    %161 = vmatpush2.msra.mxu0 0.0
    %162 = vmatprep.subr.mxu0 0.0
    %163 = vmatpush2.msra.mxu0 0.0
    %164 = vmatprep.subr.mxu0 0.0
    %165 = vmatpush2.msra.mxu0 0.0
    %166 = vmatprep.subr.mxu0 0.0
    %167 = vmatpush2.msra.mxu0 0.0
    %168 = vmatprep.subr.mxu0 0.0
    %169 = vmatpush2.msra.mxu0 0.0
    %170 = vmatprep.subr.mxu0 0.0
    %171 = vmatpush2.msra.mxu0 0.0
    %172 = vmatprep.subr.mxu0 0.0
    %173 = vmatpush2.msra.mxu0 0.0
    %174 = vmatprep.subr.mxu0 0.0
    %175 = vmatpush2.msra.mxu0 0.0
    %176 = vmatprep.subr.mxu0 0.0
    %177 = vmatpush2.msra.mxu0 0.0
    %178 = vmatprep.subr.mxu0 0.0
    %179 = vmatpush2.msra.mxu0 0.0
    %180 = vmatprep.subr.mxu0 0.0
    %181 = vmatpush2.msra.mxu0 0.0
    %182 = vmatprep.subr.mxu0 0.0
    %183 = vmatpush2.msra.mxu0 0.0
    %184 = vmatprep.mubr.f32.mxu0 0.0
    %185 = vmatmul.mubr.f32.gmra.mxu0 %v115
    %v186 = vpop.f32.mrf.mxu0
    %v187 = vadd.f32 %v112, %v186
    %v188 = vpop.f32.mrf.mxu0
    %189 = vmatprep.mubr.f32.mxu0 0.0
    %190 = vmatmul.mubr.f32.gmra.mxu0 %v118
    %v191 = vpop.f32.mrf.mxu0
    %v192 = vadd.f32 %v112, %v191
    %v193 = vpop.f32.mrf.mxu0
    %194 = vdwg.mxu0
    %v195 = vmax.f32 %v187, 0.0
    %v196 = vmax.f32 %v192, 0.0
    %v198 = vsel %vm23, %v17, 0
    %v201 = vsel %vm23, %v18, 0
    %v204 = vsel %vm23, %v19, 0
    %206 = vmatprep.subr.mxu0 0.0
    %207 = vmatpush1.msra.mxu0 0.0
    %208 = vmatprep.subr.mxu0 0.0
    %209 = vmatpush1.msra.mxu0 0.0
    %210 = vmatprep.subr.mxu0 0.0
    %211 = vmatpush1.msra.mxu0 0.0
    %212 = vmatprep.subr.mxu0 0.0
    %213 = vmatpush1.msra.mxu0 0.0
    %214 = vmatprep.subr.mxu0 0.0
    %215 = vmatpush1.msra.mxu0 0.0
    %216 = vmatprep.subr.mxu0 0.0
    %217 = vmatpush1.msra.mxu0 0.0
    %218 = vmatprep.subr.mxu0 0.0
    %219 = vmatpush1.msra.mxu0 0.0
    %220 = vmatprep.subr.mxu0 0.0
    %221 = vmatpush1.msra.mxu0 0.0
    %222 = vmatprep.subr.mxu0 0.0
    %223 = vmatpush1.msra.mxu0 0.0
    %224 = vmatprep.subr.mxu0 0.0
    %225 = vmatpush1.msra.mxu0 0.0
    %226 = vmatprep.subr.mxu0 0.0
    %227 = vmatpush1.msra.mxu0 0.0
    %228 = vmatprep.subr.mxu0 0.0
    %229 = vmatpush1.msra.mxu0 0.0
    %230 = vmatprep.subr.mxu0 0.0
    %231 = vmatpush1.msra.mxu0 0.0
    %232 = vmatprep.subr.mxu0 0.0
    %233 = vmatpush1.msra.mxu0 0.0
    %234 = vmatprep.subr.mxu0 0.0
    %235 = vmatpush1.msra.mxu0 %v196
    %236 = vmatprep.subr.mxu0 0.0
    %237 = vmatpush1.msra.mxu0 %v195
    %238 = vmatprep.subr.mxu0 0.0
    %239 = vmatpush2.msra.mxu0 0.0
    %240 = vmatprep.subr.mxu0 0.0
    %241 = vmatpush2.msra.mxu0 0.0
    %242 = vmatprep.subr.mxu0 0.0
    %243 = vmatpush2.msra.mxu0 0.0
    %244 = vmatprep.subr.mxu0 0.0
    %245 = vmatpush2.msra.mxu0 0.0
    %246 = vmatprep.subr.mxu0 0.0
    %247 = vmatpush2.msra.mxu0 0.0
    %248 = vmatprep.subr.mxu0 0.0
    %249 = vmatpush2.msra.mxu0 0.0
    %250 = vmatprep.subr.mxu0 0.0
    %251 = vmatpush2.msra.mxu0 0.0
    %252 = vmatprep.subr.mxu0 0.0
    %253 = vmatpush2.msra.mxu0 0.0
    %254 = vmatprep.subr.mxu0 0.0
    %255 = vmatpush2.msra.mxu0 0.0
    %256 = vmatprep.subr.mxu0 0.0
    %257 = vmatpush2.msra.mxu0 0.0
    %258 = vmatprep.subr.mxu0 0.0
    %259 = vmatpush2.msra.mxu0 0.0
    %260 = vmatprep.subr.mxu0 0.0
    %261 = vmatpush2.msra.mxu0 0.0
    %262 = vmatprep.subr.mxu0 0.0
    %263 = vmatpush2.msra.mxu0 0.0
    %264 = vmatprep.subr.mxu0 0.0
    %265 = vmatpush2.msra.mxu0 0.0
    %266 = vmatprep.subr.mxu0 0.0
    %267 = vmatpush2.msra.mxu0 0.0
    %268 = vmatprep.subr.mxu0 0.0
    %269 = vmatpush2.msra.mxu0 0.0
    %270 = vmatprep.mubr.f32.mxu0 0.0
    %271 = vmatmul.mubr.f32.gmra.mxu0 %v25
    %v272 = vpop.f32.mrf.mxu0
    %v273 = vadd.f32 0.0, %v272
    %v274 = vpop.f32.mrf.mxu0
    %275 = vmatprep.mubr.f32.mxu0 0.0
    %276 = vmatmul.mubr.f32.gmra.mxu0 %v28
    %v277 = vpop.f32.mrf.mxu0
    %v278 = vadd.f32 0.0, %v277
    %v279 = vpop.f32.mrf.mxu0
    %280 = vmatprep.mubr.f32.mxu0 0.0
    %281 = vmatmul.mubr.f32.gmra.mxu0 %v198
    %v282 = vpop.f32.mrf.mxu0
    %v283 = vadd.f32 0.0, %v282
    %v284 = vpop.f32.mrf.mxu0
    %285 = vmatprep.mubr.f32.mxu0 0.0
    %286 = vmatmul.mubr.f32.gmra.mxu0 %v201
    %v287 = vpop.f32.mrf.mxu0
    %v288 = vadd.f32 0.0, %v287
    %v289 = vpop.f32.mrf.mxu0
    %290 = vmatprep.mubr.f32.mxu0 0.0
    %291 = vmatmul.mubr.f32.gmra.mxu0 %v204
    %v292 = vpop.f32.mrf.mxu0
    %v293 = vadd.f32 0.0, %v292
    %v294 = vpop.f32.mrf.mxu0
    %295 = vdwg.mxu0
    %v296 = vld [vmem:[%s2 + $0x60] sm:$0xff]
    %v297 = vld [vmem:[%s2 + $0x68] sm:$0xff]
    %v298 = vld [vmem:[%s2 + $0x70] sm:$0xff]
    %v299 = vld [vmem:[%s2 + $0x78] sm:$0xff]
    %v300 = vld [vmem:[%s2 + $0x80] sm:$0xff]
    %v301 = vld [vmem:[%s2 + $0x88] sm:$0xff]
    %v302 = vld [vmem:[%s2 + $0x90] sm:$0xff]
    %v303 = vld [vmem:[%s2 + $0x98] sm:$0xff]
    %v305 = vsel %vm113, %v288, 0
    %307 = vmatprep.subr.mxu0 0.0
    %308 = vmatpush1.msra.mxu0 0.0
    %309 = vmatprep.subr.mxu0 0.0
    %310 = vmatpush1.msra.mxu0 0.0
    %311 = vmatprep.subr.mxu0 0.0
    %312 = vmatpush1.msra.mxu0 0.0
    %313 = vmatprep.subr.mxu0 0.0
    %314 = vmatpush1.msra.mxu0 0.0
    %315 = vmatprep.subr.mxu0 0.0
    %316 = vmatpush1.msra.mxu0 0.0
    %317 = vmatprep.subr.mxu0 0.0
    %318 = vmatpush1.msra.mxu0 0.0
    %319 = vmatprep.subr.mxu0 0.0
    %320 = vmatpush1.msra.mxu0 0.0
    %321 = vmatprep.subr.mxu0 0.0
    %322 = vmatpush1.msra.mxu0 0.0
    %323 = vmatprep.subr.mxu0 0.0
    %324 = vmatpush1.msra.mxu0 0.0
    %325 = vmatprep.subr.mxu0 0.0
    %326 = vmatpush1.msra.mxu0 0.0
    %327 = vmatprep.subr.mxu0 0.0
    %328 = vmatpush1.msra.mxu0 0.0
    %329 = vmatprep.subr.mxu0 0.0
    %330 = vmatpush1.msra.mxu0 0.0
    %331 = vmatprep.subr.mxu0 0.0
    %332 = vmatpush1.msra.mxu0 %v303
    %333 = vmatprep.subr.mxu0 0.0
    %334 = vmatpush1.msra.mxu0 %v302
    %335 = vmatprep.subr.mxu0 0.0
    %336 = vmatpush1.msra.mxu0 %v301
    %337 = vmatprep.subr.mxu0 0.0
    %338 = vmatpush1.msra.mxu0 %v300
    %339 = vmatprep.subr.mxu0 0.0
    %340 = vmatpush2.msra.mxu0 0.0
    %341 = vmatprep.subr.mxu0 0.0
    %342 = vmatpush2.msra.mxu0 0.0
    %343 = vmatprep.subr.mxu0 0.0
    %344 = vmatpush2.msra.mxu0 0.0
    %345 = vmatprep.subr.mxu0 0.0
    %346 = vmatpush2.msra.mxu0 0.0
    %347 = vmatprep.subr.mxu0 0.0
    %348 = vmatpush2.msra.mxu0 0.0
    %349 = vmatprep.subr.mxu0 0.0
    %350 = vmatpush2.msra.mxu0 0.0
    %351 = vmatprep.subr.mxu0 0.0
    %352 = vmatpush2.msra.mxu0 0.0
    %353 = vmatprep.subr.mxu0 0.0
    %354 = vmatpush2.msra.mxu0 0.0
    %355 = vmatprep.subr.mxu0 0.0
    %356 = vmatpush2.msra.mxu0 0.0
    %357 = vmatprep.subr.mxu0 0.0
    %358 = vmatpush2.msra.mxu0 0.0
    %359 = vmatprep.subr.mxu0 0.0
    %360 = vmatpush2.msra.mxu0 0.0
    %361 = vmatprep.subr.mxu0 0.0
    %362 = vmatpush2.msra.mxu0 0.0
    %363 = vmatprep.subr.mxu0 0.0
    %364 = vmatpush2.msra.mxu0 0.0
    %365 = vmatprep.subr.mxu0 0.0
    %366 = vmatpush2.msra.mxu0 0.0
    %367 = vmatprep.subr.mxu0 0.0
    %368 = vmatpush2.msra.mxu0 0.0
    %369 = vmatprep.subr.mxu0 0.0
    %370 = vmatpush2.msra.mxu0 0.0
    %371 = vmatprep.mubr.f32.mxu0 0.0
    %372 = vmatmul.mubr.f32.gmra.mxu0 %v305
    %v373 = vpop.f32.mrf.mxu0
    %v374 = vadd.f32 0.0, %v373
    %v375 = vpop.f32.mrf.mxu0
    %376 = vdwg.mxu0
    %v378 = vsel %vm113, %v283, 0
    %380 = vmatprep.subr.mxu0 0.0
    %381 = vmatpush1.msra.mxu0 0.0
    %382 = vmatprep.subr.mxu0 0.0
    %383 = vmatpush1.msra.mxu0 0.0
    %384 = vmatprep.subr.mxu0 0.0
    %385 = vmatpush1.msra.mxu0 0.0
    %386 = vmatprep.subr.mxu0 0.0
    %387 = vmatpush1.msra.mxu0 0.0
    %388 = vmatprep.subr.mxu0 0.0
    %389 = vmatpush1.msra.mxu0 0.0
    %390 = vmatprep.subr.mxu0 0.0
    %391 = vmatpush1.msra.mxu0 0.0
    %392 = vmatprep.subr.mxu0 0.0
    %393 = vmatpush1.msra.mxu0 0.0
    %394 = vmatprep.subr.mxu0 0.0
    %395 = vmatpush1.msra.mxu0 0.0
    %396 = vmatprep.subr.mxu0 0.0
    %397 = vmatpush1.msra.mxu0 0.0
    %398 = vmatprep.subr.mxu0 0.0
    %399 = vmatpush1.msra.mxu0 0.0
    %400 = vmatprep.subr.mxu0 0.0
    %401 = vmatpush1.msra.mxu0 0.0
    %402 = vmatprep.subr.mxu0 0.0
    %403 = vmatpush1.msra.mxu0 0.0
    %404 = vmatprep.subr.mxu0 0.0
    %405 = vmatpush1.msra.mxu0 %v299
    %406 = vmatprep.subr.mxu0 0.0
    %407 = vmatpush1.msra.mxu0 %v298
    %408 = vmatprep.subr.mxu0 0.0
    %409 = vmatpush1.msra.mxu0 %v297
    %410 = vmatprep.subr.mxu0 0.0
    %411 = vmatpush1.msra.mxu0 %v296
    %412 = vmatprep.subr.mxu0 0.0
    %413 = vmatpush2.msra.mxu0 0.0
    %414 = vmatprep.subr.mxu0 0.0
    %415 = vmatpush2.msra.mxu0 0.0
    %416 = vmatprep.subr.mxu0 0.0
    %417 = vmatpush2.msra.mxu0 0.0
    %418 = vmatprep.subr.mxu0 0.0
    %419 = vmatpush2.msra.mxu0 0.0
    %420 = vmatprep.subr.mxu0 0.0
    %421 = vmatpush2.msra.mxu0 0.0
    %422 = vmatprep.subr.mxu0 0.0
    %423 = vmatpush2.msra.mxu0 0.0
    %424 = vmatprep.subr.mxu0 0.0
    %425 = vmatpush2.msra.mxu0 0.0
    %426 = vmatprep.subr.mxu0 0.0
    %427 = vmatpush2.msra.mxu0 0.0
    %428 = vmatprep.subr.mxu0 0.0
    %429 = vmatpush2.msra.mxu0 0.0
    %430 = vmatprep.subr.mxu0 0.0
    %431 = vmatpush2.msra.mxu0 0.0
    %432 = vmatprep.subr.mxu0 0.0
    %433 = vmatpush2.msra.mxu0 0.0
    %434 = vmatprep.subr.mxu0 0.0
    %435 = vmatpush2.msra.mxu0 0.0
    %436 = vmatprep.subr.mxu0 0.0
    %437 = vmatpush2.msra.mxu0 0.0
    %438 = vmatprep.subr.mxu0 0.0
    %439 = vmatpush2.msra.mxu0 0.0
    %440 = vmatprep.subr.mxu0 0.0
    %441 = vmatpush2.msra.mxu0 0.0
    %442 = vmatprep.subr.mxu0 0.0
    %443 = vmatpush2.msra.mxu0 0.0
    %444 = vmatprep.mubr.f32.mxu0 0.0
    %445 = vmatmul.mubr.f32.gmra.mxu0 %v378
    %v446 = vpop.f32.mrf.mxu0
    %v447 = vadd.f32 %v374, %v446
    %v448 = vpop.f32.mrf.mxu0
    %449 = vdwg.mxu0
    %v450 = vld [vmem:[%s2 + $0xa0] sm:$0xff]
    %v451 = vld [vmem:[%s2 + $0xa8] sm:$0xff]
    %v452 = vld [vmem:[%s2 + $0xb0] sm:$0xff]
    %v453 = vld [vmem:[%s2 + $0xb8] sm:$0xff]
    %v455 = vsel %vm113, %v293, 0
    %457 = vmatprep.subr.mxu0 0.0
    %458 = vmatpush1.msra.mxu0 0.0
    %459 = vmatprep.subr.mxu0 0.0
    %460 = vmatpush1.msra.mxu0 0.0
    %461 = vmatprep.subr.mxu0 0.0
    %462 = vmatpush1.msra.mxu0 0.0
    %463 = vmatprep.subr.mxu0 0.0
    %464 = vmatpush1.msra.mxu0 0.0
    %465 = vmatprep.subr.mxu0 0.0
    %466 = vmatpush1.msra.mxu0 0.0
    %467 = vmatprep.subr.mxu0 0.0
    %468 = vmatpush1.msra.mxu0 0.0
    %469 = vmatprep.subr.mxu0 0.0
    %470 = vmatpush1.msra.mxu0 0.0
    %471 = vmatprep.subr.mxu0 0.0
    %472 = vmatpush1.msra.mxu0 0.0
    %473 = vmatprep.subr.mxu0 0.0
    %474 = vmatpush1.msra.mxu0 0.0
    %475 = vmatprep.subr.mxu0 0.0
    %476 = vmatpush1.msra.mxu0 0.0
    %477 = vmatprep.subr.mxu0 0.0
    %478 = vmatpush1.msra.mxu0 0.0
    %479 = vmatprep.subr.mxu0 0.0
    %480 = vmatpush1.msra.mxu0 0.0
    %481 = vmatprep.subr.mxu0 0.0
    %482 = vmatpush1.msra.mxu0 %v453
    %483 = vmatprep.subr.mxu0 0.0
    %484 = vmatpush1.msra.mxu0 %v452
    %485 = vmatprep.subr.mxu0 0.0
    %486 = vmatpush1.msra.mxu0 %v451
    %487 = vmatprep.subr.mxu0 0.0
    %488 = vmatpush1.msra.mxu0 %v450
    %489 = vmatprep.subr.mxu0 0.0
    %490 = vmatpush2.msra.mxu0 0.0
    %491 = vmatprep.subr.mxu0 0.0
    %492 = vmatpush2.msra.mxu0 0.0
    %493 = vmatprep.subr.mxu0 0.0
    %494 = vmatpush2.msra.mxu0 0.0
    %495 = vmatprep.subr.mxu0 0.0
    %496 = vmatpush2.msra.mxu0 0.0
    %497 = vmatprep.subr.mxu0 0.0
    %498 = vmatpush2.msra.mxu0 0.0
    %499 = vmatprep.subr.mxu0 0.0
    %500 = vmatpush2.msra.mxu0 0.0
    %501 = vmatprep.subr.mxu0 0.0
    %502 = vmatpush2.msra.mxu0 0.0
    %503 = vmatprep.subr.mxu0 0.0
    %504 = vmatpush2.msra.mxu0 0.0
    %505 = vmatprep.subr.mxu0 0.0
    %506 = vmatpush2.msra.mxu0 0.0
    %507 = vmatprep.subr.mxu0 0.0
    %508 = vmatpush2.msra.mxu0 0.0
    %509 = vmatprep.subr.mxu0 0.0
    %510 = vmatpush2.msra.mxu0 0.0
    %511 = vmatprep.subr.mxu0 0.0
    %512 = vmatpush2.msra.mxu0 0.0
    %513 = vmatprep.subr.mxu0 0.0
    %514 = vmatpush2.msra.mxu0 0.0
    %515 = vmatprep.subr.mxu0 0.0
    %516 = vmatpush2.msra.mxu0 0.0
    %517 = vmatprep.subr.mxu0 0.0
    %518 = vmatpush2.msra.mxu0 0.0
    %519 = vmatprep.subr.mxu0 0.0
    %520 = vmatpush2.msra.mxu0 0.0
    %521 = vmatprep.mubr.f32.mxu0 0.0
    %522 = vmatmul.mubr.f32.gmra.mxu0 %v455
    %v523 = vpop.f32.mrf.mxu0
    %v524 = vadd.f32 0.0, %v523
    %v525 = vpop.f32.mrf.mxu0
    %526 = vdwg.mxu0
    %v527 = vadd.f32 %v447, %v524
    %v528 = vld [vmem:[%s2 + $0x20] sm:$0xff]
    %v529 = vld [vmem:[%s2 + $0x28] sm:$0xff]
    %v530 = vld [vmem:[%s2 + $0x30] sm:$0xff]
    %v531 = vld [vmem:[%s2 + $0x38] sm:$0xff]
    %v532 = vlaneseq
    %v533 = vshrl.u32 %v532, 7
    %v534 = vsub.s32 1, %v533
    %v535 = vrot.slane %v20, %v534
    %v537 = vsel %vm113, %v273, 0
    %v540 = vsel %vm113, %v278, 0
    %542 = vmatprep.subr.mxu0 0.0
    %543 = vmatpush1.msra.mxu0 0.0
    %544 = vmatprep.subr.mxu0 0.0
    %545 = vmatpush1.msra.mxu0 0.0
    %546 = vmatprep.subr.mxu0 0.0
    %547 = vmatpush1.msra.mxu0 0.0
    %548 = vmatprep.subr.mxu0 0.0
    %549 = vmatpush1.msra.mxu0 0.0
    %550 = vmatprep.subr.mxu0 0.0
    %551 = vmatpush1.msra.mxu0 0.0
    %552 = vmatprep.subr.mxu0 0.0
    %553 = vmatpush1.msra.mxu0 0.0
    %554 = vmatprep.subr.mxu0 0.0
    %555 = vmatpush1.msra.mxu0 0.0
    %556 = vmatprep.subr.mxu0 0.0
    %557 = vmatpush1.msra.mxu0 0.0
    %558 = vmatprep.subr.mxu0 0.0
    %559 = vmatpush1.msra.mxu0 0.0
    %560 = vmatprep.subr.mxu0 0.0
    %561 = vmatpush1.msra.mxu0 0.0
    %562 = vmatprep.subr.mxu0 0.0
    %563 = vmatpush1.msra.mxu0 0.0
    %564 = vmatprep.subr.mxu0 0.0
    %565 = vmatpush1.msra.mxu0 0.0
    %566 = vmatprep.subr.mxu0 0.0
    %567 = vmatpush1.msra.mxu0 %v531
    %568 = vmatprep.subr.mxu0 0.0
    %569 = vmatpush1.msra.mxu0 %v530
    %570 = vmatprep.subr.mxu0 0.0
    %571 = vmatpush1.msra.mxu0 %v529
    %572 = vmatprep.subr.mxu0 0.0
    %573 = vmatpush1.msra.mxu0 %v528
    %574 = vmatprep.subr.mxu0 0.0
    %575 = vmatpush2.msra.mxu0 0.0
    %576 = vmatprep.subr.mxu0 0.0
    %577 = vmatpush2.msra.mxu0 0.0
    %578 = vmatprep.subr.mxu0 0.0
    %579 = vmatpush2.msra.mxu0 0.0
    %580 = vmatprep.subr.mxu0 0.0
    %581 = vmatpush2.msra.mxu0 0.0
    %582 = vmatprep.subr.mxu0 0.0
    %583 = vmatpush2.msra.mxu0 0.0
    %584 = vmatprep.subr.mxu0 0.0
    %585 = vmatpush2.msra.mxu0 0.0
    %586 = vmatprep.subr.mxu0 0.0
    %587 = vmatpush2.msra.mxu0 0.0
    %588 = vmatprep.subr.mxu0 0.0
    %589 = vmatpush2.msra.mxu0 0.0
    %590 = vmatprep.subr.mxu0 0.0
    %591 = vmatpush2.msra.mxu0 0.0
    %592 = vmatprep.subr.mxu0 0.0
    %593 = vmatpush2.msra.mxu0 0.0
    %594 = vmatprep.subr.mxu0 0.0
    %595 = vmatpush2.msra.mxu0 0.0
    %596 = vmatprep.subr.mxu0 0.0
    %597 = vmatpush2.msra.mxu0 0.0
    %598 = vmatprep.subr.mxu0 0.0
    %599 = vmatpush2.msra.mxu0 0.0
    %600 = vmatprep.subr.mxu0 0.0
    %601 = vmatpush2.msra.mxu0 0.0
    %602 = vmatprep.subr.mxu0 0.0
    %603 = vmatpush2.msra.mxu0 0.0
    %604 = vmatprep.subr.mxu0 0.0
    %605 = vmatpush2.msra.mxu0 0.0
    %606 = vmatprep.mubr.f32.mxu0 0.0
    %607 = vmatmul.mubr.f32.gmra.mxu0 %v537
    %v608 = vpop.f32.mrf.mxu0
    %v609 = vadd.f32 %v535, %v608
    %v610 = vpop.f32.mrf.mxu0
    %611 = vmatprep.mubr.f32.mxu0 0.0
    %612 = vmatmul.mubr.f32.gmra.mxu0 %v540
    %v613 = vpop.f32.mrf.mxu0
    %v614 = vadd.f32 %v535, %v613
    %v615 = vpop.f32.mrf.mxu0
    %616 = vdwg.mxu0
    %v617 = vmax.f32 %v609, 0.0
    %v618 = vmax.f32 %v614, 0.0
    %619 = vmatprep.subr.mxu0 0.0
    %620 = vmatpush1.msra.mxu0 0.0
    %621 = vmatprep.subr.mxu0 0.0
    %622 = vmatpush1.msra.mxu0 0.0
    %623 = vmatprep.subr.mxu0 0.0
    %624 = vmatpush1.msra.mxu0 0.0
    %625 = vmatprep.subr.mxu0 0.0
    %626 = vmatpush1.msra.mxu0 0.0
    %627 = vmatprep.subr.mxu0 0.0
    %628 = vmatpush1.msra.mxu0 0.0
    %629 = vmatprep.subr.mxu0 0.0
    %630 = vmatpush1.msra.mxu0 0.0
    %631 = vmatprep.subr.mxu0 0.0
    %632 = vmatpush1.msra.mxu0 0.0
    %633 = vmatprep.subr.mxu0 0.0
    %634 = vmatpush1.msra.mxu0 0.0
    %635 = vmatprep.subr.mxu0 0.0
    %636 = vmatpush1.msra.mxu0 0.0
    %637 = vmatprep.subr.mxu0 0.0
    %638 = vmatpush1.msra.mxu0 0.0
    %639 = vmatprep.subr.mxu0 0.0
    %640 = vmatpush1.msra.mxu0 0.0
    %641 = vmatprep.subr.mxu0 0.0
    %642 = vmatpush1.msra.mxu0 0.0
    %643 = vmatprep.subr.mxu0 0.0
    %644 = vmatpush1.msra.mxu0 0.0
    %645 = vmatprep.subr.mxu0 0.0
    %646 = vmatpush1.msra.mxu0 0.0
    %647 = vmatprep.subr.mxu0 0.0
    %648 = vmatpush1.msra.mxu0 %v618
    %649 = vmatprep.subr.mxu0 0.0
    %650 = vmatpush1.msra.mxu0 %v617
    %651 = vmatprep.subr.mxu0 0.0
    %652 = vmatpush2.msra.mxu0 0.0
    %653 = vmatprep.subr.mxu0 0.0
    %654 = vmatpush2.msra.mxu0 0.0
    %655 = vmatprep.subr.mxu0 0.0
    %656 = vmatpush2.msra.mxu0 0.0
    %657 = vmatprep.subr.mxu0 0.0
    %658 = vmatpush2.msra.mxu0 0.0
    %659 = vmatprep.subr.mxu0 0.0
    %660 = vmatpush2.msra.mxu0 0.0
    %661 = vmatprep.subr.mxu0 0.0
    %662 = vmatpush2.msra.mxu0 0.0
    %663 = vmatprep.subr.mxu0 0.0
    %664 = vmatpush2.msra.mxu0 0.0
    %665 = vmatprep.subr.mxu0 0.0
    %666 = vmatpush2.msra.mxu0 0.0
    %667 = vmatprep.subr.mxu0 0.0
    %668 = vmatpush2.msra.mxu0 0.0
    %669 = vmatprep.subr.mxu0 0.0
    %670 = vmatpush2.msra.mxu0 0.0
    %671 = vmatprep.subr.mxu0 0.0
    %672 = vmatpush2.msra.mxu0 0.0
    %673 = vmatprep.subr.mxu0 0.0
    %674 = vmatpush2.msra.mxu0 0.0
    %675 = vmatprep.subr.mxu0 0.0
    %676 = vmatpush2.msra.mxu0 0.0
    %677 = vmatprep.subr.mxu0 0.0
    %678 = vmatpush2.msra.mxu0 0.0
    %679 = vmatprep.subr.mxu0 0.0
    %680 = vmatpush2.msra.mxu0 0.0
    %681 = vmatprep.subr.mxu0 0.0
    %682 = vmatpush2.msra.mxu0 0.0
    %683 = vmatprep.mubr.f32.mxu0 0.0
    %684 = vmatmul.mubr.f32.gmra.mxu0 %v25
    %v685 = vpop.f32.mrf.mxu0
    %v686 = vadd.f32 0.0, %v685
    %v687 = vpop.f32.mrf.mxu0
    %688 = vmatprep.mubr.f32.mxu0 0.0
    %689 = vmatmul.mubr.f32.gmra.mxu0 %v28
    %v690 = vpop.f32.mrf.mxu0
    %v691 = vadd.f32 0.0, %v690
    %v692 = vpop.f32.mrf.mxu0
    %693 = vmatprep.mubr.f32.mxu0 0.0
    %694 = vmatmul.mubr.f32.gmra.mxu0 %v198
    %v695 = vpop.f32.mrf.mxu0
    %v696 = vadd.f32 0.0, %v695
    %v697 = vpop.f32.mrf.mxu0
    %698 = vmatprep.mubr.f32.mxu0 0.0
    %699 = vmatmul.mubr.f32.gmra.mxu0 %v201
    %v700 = vpop.f32.mrf.mxu0
    %v701 = vadd.f32 0.0, %v700
    %v702 = vpop.f32.mrf.mxu0
    %703 = vmatprep.mubr.f32.mxu0 0.0
    %704 = vmatmul.mubr.f32.gmra.mxu0 %v204
    %v705 = vpop.f32.mrf.mxu0
    %v706 = vadd.f32 0.0, %v705
    %v707 = vpop.f32.mrf.mxu0
    %708 = vdwg.mxu0
    %v709 = vld [vmem:[%s2 + $0xc0] sm:$0xff]
    %v710 = vld [vmem:[%s2 + $0xc8] sm:$0xff]
    %v711 = vld [vmem:[%s2 + $0xd0] sm:$0xff]
    %v712 = vld [vmem:[%s2 + $0xd8] sm:$0xff]
    %v714 = vsel %vm113, %v696, 0
    %716 = vmatprep.subr.mxu0 0.0
    %717 = vmatpush1.msra.mxu0 0.0
    %718 = vmatprep.subr.mxu0 0.0
    %719 = vmatpush1.msra.mxu0 0.0
    %720 = vmatprep.subr.mxu0 0.0
    %721 = vmatpush1.msra.mxu0 0.0
    %722 = vmatprep.subr.mxu0 0.0
    %723 = vmatpush1.msra.mxu0 0.0
    %724 = vmatprep.subr.mxu0 0.0
    %725 = vmatpush1.msra.mxu0 0.0
    %726 = vmatprep.subr.mxu0 0.0
    %727 = vmatpush1.msra.mxu0 0.0
    %728 = vmatprep.subr.mxu0 0.0
    %729 = vmatpush1.msra.mxu0 0.0
    %730 = vmatprep.subr.mxu0 0.0
    %731 = vmatpush1.msra.mxu0 0.0
    %732 = vmatprep.subr.mxu0 0.0
    %733 = vmatpush1.msra.mxu0 0.0
    %734 = vmatprep.subr.mxu0 0.0
    %735 = vmatpush1.msra.mxu0 0.0
    %736 = vmatprep.subr.mxu0 0.0
    %737 = vmatpush1.msra.mxu0 0.0
    %738 = vmatprep.subr.mxu0 0.0
    %739 = vmatpush1.msra.mxu0 0.0
    %740 = vmatprep.subr.mxu0 0.0
    %741 = vmatpush1.msra.mxu0 %v712
    %742 = vmatprep.subr.mxu0 0.0
    %743 = vmatpush1.msra.mxu0 %v711
    %744 = vmatprep.subr.mxu0 0.0
    %745 = vmatpush1.msra.mxu0 %v710
    %746 = vmatprep.subr.mxu0 0.0
    %747 = vmatpush1.msra.mxu0 %v709
    %748 = vmatprep.subr.mxu0 0.0
    %749 = vmatpush2.msra.mxu0 0.0
    %750 = vmatprep.subr.mxu0 0.0
    %751 = vmatpush2.msra.mxu0 0.0
    %752 = vmatprep.subr.mxu0 0.0
    %753 = vmatpush2.msra.mxu0 0.0
    %754 = vmatprep.subr.mxu0 0.0
    %755 = vmatpush2.msra.mxu0 0.0
    %756 = vmatprep.subr.mxu0 0.0
    %757 = vmatpush2.msra.mxu0 0.0
    %758 = vmatprep.subr.mxu0 0.0
    %759 = vmatpush2.msra.mxu0 0.0
    %760 = vmatprep.subr.mxu0 0.0
    %761 = vmatpush2.msra.mxu0 0.0
    %762 = vmatprep.subr.mxu0 0.0
    %763 = vmatpush2.msra.mxu0 0.0
    %764 = vmatprep.subr.mxu0 0.0
    %765 = vmatpush2.msra.mxu0 0.0
    %766 = vmatprep.subr.mxu0 0.0
    %767 = vmatpush2.msra.mxu0 0.0
    %768 = vmatprep.subr.mxu0 0.0
    %769 = vmatpush2.msra.mxu0 0.0
    %770 = vmatprep.subr.mxu0 0.0
    %771 = vmatpush2.msra.mxu0 0.0
    %772 = vmatprep.subr.mxu0 0.0
    %773 = vmatpush2.msra.mxu0 0.0
    %774 = vmatprep.subr.mxu0 0.0
    %775 = vmatpush2.msra.mxu0 0.0
    %776 = vmatprep.subr.mxu0 0.0
    %777 = vmatpush2.msra.mxu0 0.0
    %778 = vmatprep.subr.mxu0 0.0
    %779 = vmatpush2.msra.mxu0 0.0
    %780 = vmatprep.mubr.f32.mxu0 0.0
    %781 = vmatmul.mubr.f32.gmra.mxu0 %v714
    %v782 = vpop.f32.mrf.mxu0
    %v783 = vadd.f32 0.0, %v782
    %v784 = vpop.f32.mrf.mxu0
    %785 = vdwg.mxu0
    %v786 = vadd.f32 %v527, %v783
    %v787 = vld [vmem:[%s2 + $0xe0] sm:$0xff]
    %v788 = vld [vmem:[%s2 + $0xe8] sm:$0xff]
    %v789 = vld [vmem:[%s2 + $0xf0] sm:$0xff]
    %v790 = vld [vmem:[%s2 + $0xf8] sm:$0xff]
    %v792 = vsel %vm113, %v701, 0
    %794 = vmatprep.subr.mxu0 0.0
    %795 = vmatpush1.msra.mxu0 0.0
    %796 = vmatprep.subr.mxu0 0.0
    %797 = vmatpush1.msra.mxu0 0.0
    %798 = vmatprep.subr.mxu0 0.0
    %799 = vmatpush1.msra.mxu0 0.0
    %800 = vmatprep.subr.mxu0 0.0
    %801 = vmatpush1.msra.mxu0 0.0
    %802 = vmatprep.subr.mxu0 0.0
    %803 = vmatpush1.msra.mxu0 0.0
    %804 = vmatprep.subr.mxu0 0.0
    %805 = vmatpush1.msra.mxu0 0.0
    %806 = vmatprep.subr.mxu0 0.0
    %807 = vmatpush1.msra.mxu0 0.0
    %808 = vmatprep.subr.mxu0 0.0
    %809 = vmatpush1.msra.mxu0 0.0
    %810 = vmatprep.subr.mxu0 0.0
    %811 = vmatpush1.msra.mxu0 0.0
    %812 = vmatprep.subr.mxu0 0.0
    %813 = vmatpush1.msra.mxu0 0.0
    %814 = vmatprep.subr.mxu0 0.0
    %815 = vmatpush1.msra.mxu0 0.0
    %816 = vmatprep.subr.mxu0 0.0
    %817 = vmatpush1.msra.mxu0 0.0
    %818 = vmatprep.subr.mxu0 0.0
    %819 = vmatpush1.msra.mxu0 %v790
    %820 = vmatprep.subr.mxu0 0.0
    %821 = vmatpush1.msra.mxu0 %v789
    %822 = vmatprep.subr.mxu0 0.0
    %823 = vmatpush1.msra.mxu0 %v788
    %824 = vmatprep.subr.mxu0 0.0
    %825 = vmatpush1.msra.mxu0 %v787
    %826 = vmatprep.subr.mxu0 0.0
    %827 = vmatpush2.msra.mxu0 0.0
    %828 = vmatprep.subr.mxu0 0.0
    %829 = vmatpush2.msra.mxu0 0.0
    %830 = vmatprep.subr.mxu0 0.0
    %831 = vmatpush2.msra.mxu0 0.0
    %832 = vmatprep.subr.mxu0 0.0
    %833 = vmatpush2.msra.mxu0 0.0
    %834 = vmatprep.subr.mxu0 0.0
    %835 = vmatpush2.msra.mxu0 0.0
    %836 = vmatprep.subr.mxu0 0.0
    %837 = vmatpush2.msra.mxu0 0.0
    %838 = vmatprep.subr.mxu0 0.0
    %839 = vmatpush2.msra.mxu0 0.0
    %840 = vmatprep.subr.mxu0 0.0
    %841 = vmatpush2.msra.mxu0 0.0
    %842 = vmatprep.subr.mxu0 0.0
    %843 = vmatpush2.msra.mxu0 0.0
    %844 = vmatprep.subr.mxu0 0.0
    %845 = vmatpush2.msra.mxu0 0.0
    %846 = vmatprep.subr.mxu0 0.0
    %847 = vmatpush2.msra.mxu0 0.0
    %848 = vmatprep.subr.mxu0 0.0
    %849 = vmatpush2.msra.mxu0 0.0
    %850 = vmatprep.subr.mxu0 0.0
    %851 = vmatpush2.msra.mxu0 0.0
    %852 = vmatprep.subr.mxu0 0.0
    %853 = vmatpush2.msra.mxu0 0.0
    %854 = vmatprep.subr.mxu0 0.0
    %855 = vmatpush2.msra.mxu0 0.0
    %856 = vmatprep.subr.mxu0 0.0
    %857 = vmatpush2.msra.mxu0 0.0
    %858 = vmatprep.mubr.f32.mxu0 0.0
    %859 = vmatmul.mubr.f32.gmra.mxu0 %v792
    %v860 = vpop.f32.mrf.mxu0
    %v861 = vadd.f32 0.0, %v860
    %v862 = vpop.f32.mrf.mxu0
    %863 = vdwg.mxu0
    %v864 = vadd.f32 %v786, %v861
    %v865 = vld [vmem:[%s2 + $0x100] sm:$0xff]
    %v866 = vld [vmem:[%s2 + $0x108] sm:$0xff]
    %v867 = vld [vmem:[%s2 + $0x110] sm:$0xff]
    %v868 = vld [vmem:[%s2 + $0x118] sm:$0xff]
    %v870 = vsel %vm113, %v706, 0
    %872 = vmatprep.subr.mxu0 0.0
    %873 = vmatpush1.msra.mxu0 0.0
    %874 = vmatprep.subr.mxu0 0.0
    %875 = vmatpush1.msra.mxu0 0.0
    %876 = vmatprep.subr.mxu0 0.0
    %877 = vmatpush1.msra.mxu0 0.0
    %878 = vmatprep.subr.mxu0 0.0
    %879 = vmatpush1.msra.mxu0 0.0
    %880 = vmatprep.subr.mxu0 0.0
    %881 = vmatpush1.msra.mxu0 0.0
    %882 = vmatprep.subr.mxu0 0.0
    %883 = vmatpush1.msra.mxu0 0.0
    %884 = vmatprep.subr.mxu0 0.0
    %885 = vmatpush1.msra.mxu0 0.0
    %886 = vmatprep.subr.mxu0 0.0
    %887 = vmatpush1.msra.mxu0 0.0
    %888 = vmatprep.subr.mxu0 0.0
    %889 = vmatpush1.msra.mxu0 0.0
    %890 = vmatprep.subr.mxu0 0.0
    %891 = vmatpush1.msra.mxu0 0.0
    %892 = vmatprep.subr.mxu0 0.0
    %893 = vmatpush1.msra.mxu0 0.0
    %894 = vmatprep.subr.mxu0 0.0
    %895 = vmatpush1.msra.mxu0 0.0
    %896 = vmatprep.subr.mxu0 0.0
    %897 = vmatpush1.msra.mxu0 %v868
    %898 = vmatprep.subr.mxu0 0.0
    %899 = vmatpush1.msra.mxu0 %v867
    %900 = vmatprep.subr.mxu0 0.0
    %901 = vmatpush1.msra.mxu0 %v866
    %902 = vmatprep.subr.mxu0 0.0
    %903 = vmatpush1.msra.mxu0 %v865
    %904 = vmatprep.subr.mxu0 0.0
    %905 = vmatpush2.msra.mxu0 0.0
    %906 = vmatprep.subr.mxu0 0.0
    %907 = vmatpush2.msra.mxu0 0.0
    %908 = vmatprep.subr.mxu0 0.0
    %909 = vmatpush2.msra.mxu0 0.0
    %910 = vmatprep.subr.mxu0 0.0
    %911 = vmatpush2.msra.mxu0 0.0
    %912 = vmatprep.subr.mxu0 0.0
    %913 = vmatpush2.msra.mxu0 0.0
    %914 = vmatprep.subr.mxu0 0.0
    %915 = vmatpush2.msra.mxu0 0.0
    %916 = vmatprep.subr.mxu0 0.0
    %917 = vmatpush2.msra.mxu0 0.0
    %918 = vmatprep.subr.mxu0 0.0
    %919 = vmatpush2.msra.mxu0 0.0
    %920 = vmatprep.subr.mxu0 0.0
    %921 = vmatpush2.msra.mxu0 0.0
    %922 = vmatprep.subr.mxu0 0.0
    %923 = vmatpush2.msra.mxu0 0.0
    %924 = vmatprep.subr.mxu0 0.0
    %925 = vmatpush2.msra.mxu0 0.0
    %926 = vmatprep.subr.mxu0 0.0
    %927 = vmatpush2.msra.mxu0 0.0
    %928 = vmatprep.subr.mxu0 0.0
    %929 = vmatpush2.msra.mxu0 0.0
    %930 = vmatprep.subr.mxu0 0.0
    %931 = vmatpush2.msra.mxu0 0.0
    %932 = vmatprep.subr.mxu0 0.0
    %933 = vmatpush2.msra.mxu0 0.0
    %934 = vmatprep.subr.mxu0 0.0
    %935 = vmatpush2.msra.mxu0 0.0
    %936 = vmatprep.mubr.f32.mxu0 0.0
    %937 = vmatmul.mubr.f32.gmra.mxu0 %v870
    %v938 = vpop.f32.mrf.mxu0
    %v939 = vadd.f32 0.0, %v938
    %v940 = vpop.f32.mrf.mxu0
    %941 = vdwg.mxu0
    %v942 = vadd.f32 %v864, %v939
    %v943 = vld [vmem:[%s2 + $0x40] sm:$0xff]
    %v944 = vld [vmem:[%s2 + $0x48] sm:$0xff]
    %v945 = vld [vmem:[%s2 + $0x50] sm:$0xff]
    %v946 = vld [vmem:[%s2 + $0x58] sm:$0xff]
    %v947 = vlaneseq
    %v948 = vshrl.u32 %v947, 7
    %v949 = vsub.s32 2, %v948
    %v950 = vrot.slane %v20, %v949
    %v952 = vsel %vm113, %v686, 0
    %v955 = vsel %vm113, %v691, 0
    %957 = vmatprep.subr.mxu0 0.0
    %958 = vmatpush1.msra.mxu0 0.0
    %959 = vmatprep.subr.mxu0 0.0
    %960 = vmatpush1.msra.mxu0 0.0
    %961 = vmatprep.subr.mxu0 0.0
    %962 = vmatpush1.msra.mxu0 0.0
    %963 = vmatprep.subr.mxu0 0.0
    %964 = vmatpush1.msra.mxu0 0.0
    %965 = vmatprep.subr.mxu0 0.0
    %966 = vmatpush1.msra.mxu0 0.0
    %967 = vmatprep.subr.mxu0 0.0
    %968 = vmatpush1.msra.mxu0 0.0
    %969 = vmatprep.subr.mxu0 0.0
    %970 = vmatpush1.msra.mxu0 0.0
    %971 = vmatprep.subr.mxu0 0.0
    %972 = vmatpush1.msra.mxu0 0.0
    %973 = vmatprep.subr.mxu0 0.0
    %974 = vmatpush1.msra.mxu0 0.0
    %975 = vmatprep.subr.mxu0 0.0
    %976 = vmatpush1.msra.mxu0 0.0
    %977 = vmatprep.subr.mxu0 0.0
    %978 = vmatpush1.msra.mxu0 0.0
    %979 = vmatprep.subr.mxu0 0.0
    %980 = vmatpush1.msra.mxu0 0.0
    %981 = vmatprep.subr.mxu0 0.0
    %982 = vmatpush1.msra.mxu0 %v946
    %983 = vmatprep.subr.mxu0 0.0
    %984 = vmatpush1.msra.mxu0 %v945
    %985 = vmatprep.subr.mxu0 0.0
    %986 = vmatpush1.msra.mxu0 %v944
    %987 = vmatprep.subr.mxu0 0.0
    %988 = vmatpush1.msra.mxu0 %v943
    %989 = vmatprep.subr.mxu0 0.0
    %990 = vmatpush2.msra.mxu0 0.0
    %991 = vmatprep.subr.mxu0 0.0
    %992 = vmatpush2.msra.mxu0 0.0
    %993 = vmatprep.subr.mxu0 0.0
    %994 = vmatpush2.msra.mxu0 0.0
    %995 = vmatprep.subr.mxu0 0.0
    %996 = vmatpush2.msra.mxu0 0.0
    %997 = vmatprep.subr.mxu0 0.0
    %998 = vmatpush2.msra.mxu0 0.0
    %999 = vmatprep.subr.mxu0 0.0
    %1000 = vmatpush2.msra.mxu0 0.0
    %1001 = vmatprep.subr.mxu0 0.0
    %1002 = vmatpush2.msra.mxu0 0.0
    %1003 = vmatprep.subr.mxu0 0.0
    %1004 = vmatpush2.msra.mxu0 0.0
    %1005 = vmatprep.subr.mxu0 0.0
    %1006 = vmatpush2.msra.mxu0 0.0
    %1007 = vmatprep.subr.mxu0 0.0
    %1008 = vmatpush2.msra.mxu0 0.0
    %1009 = vmatprep.subr.mxu0 0.0
    %1010 = vmatpush2.msra.mxu0 0.0
    %1011 = vmatprep.subr.mxu0 0.0
    %1012 = vmatpush2.msra.mxu0 0.0
    %1013 = vmatprep.subr.mxu0 0.0
    %1014 = vmatpush2.msra.mxu0 0.0
    %1015 = vmatprep.subr.mxu0 0.0
    %1016 = vmatpush2.msra.mxu0 0.0
    %1017 = vmatprep.subr.mxu0 0.0
    %1018 = vmatpush2.msra.mxu0 0.0
    %1019 = vmatprep.subr.mxu0 0.0
    %1020 = vmatpush2.msra.mxu0 0.0
    %1021 = vmatprep.mubr.f32.mxu0 0.0
    %1022 = vmatmul.mubr.f32.gmra.mxu0 %v952
    %v1023 = vpop.f32.mrf.mxu0
    %v1024 = vadd.f32 %v950, %v1023
    %v1025 = vpop.f32.mrf.mxu0
    %1026 = vmatprep.mubr.f32.mxu0 0.0
    %1027 = vmatmul.mubr.f32.gmra.mxu0 %v955
    %v1028 = vpop.f32.mrf.mxu0
    %v1029 = vadd.f32 %v950, %v1028
    %v1030 = vpop.f32.mrf.mxu0
    %1031 = vdwg.mxu0
    %v1032 = vmax.f32 %v1024, 0.0
    %v1033 = vmax.f32 %v1029, 0.0
    %1034 = vmatprep.subr.mxu0 0.0
    %1035 = vmatpush1.msra.mxu0 0.0
    %1036 = vmatprep.subr.mxu0 0.0
    %1037 = vmatpush1.msra.mxu0 0.0
    %1038 = vmatprep.subr.mxu0 0.0
    %1039 = vmatpush1.msra.mxu0 0.0
    %1040 = vmatprep.subr.mxu0 0.0
    %1041 = vmatpush1.msra.mxu0 0.0
    %1042 = vmatprep.subr.mxu0 0.0
    %1043 = vmatpush1.msra.mxu0 0.0
    %1044 = vmatprep.subr.mxu0 0.0
    %1045 = vmatpush1.msra.mxu0 0.0
    %1046 = vmatprep.subr.mxu0 0.0
    %1047 = vmatpush1.msra.mxu0 0.0
    %1048 = vmatprep.subr.mxu0 0.0
    %1049 = vmatpush1.msra.mxu0 0.0
    %1050 = vmatprep.subr.mxu0 0.0
    %1051 = vmatpush1.msra.mxu0 0.0
    %1052 = vmatprep.subr.mxu0 0.0
    %1053 = vmatpush1.msra.mxu0 0.0
    %1054 = vmatprep.subr.mxu0 0.0
    %1055 = vmatpush1.msra.mxu0 0.0
    %1056 = vmatprep.subr.mxu0 0.0
    %1057 = vmatpush1.msra.mxu0 0.0
    %1058 = vmatprep.subr.mxu0 0.0
    %1059 = vmatpush1.msra.mxu0 0.0
    %1060 = vmatprep.subr.mxu0 0.0
    %1061 = vmatpush1.msra.mxu0 0.0
    %1062 = vmatprep.subr.mxu0 0.0
    %1063 = vmatpush1.msra.mxu0 %v1033
    %1064 = vmatprep.subr.mxu0 0.0
    %1065 = vmatpush1.msra.mxu0 %v1032
    %1066 = vmatprep.subr.mxu0 0.0
    %1067 = vmatpush2.msra.mxu0 0.0
    %1068 = vmatprep.subr.mxu0 0.0
    %1069 = vmatpush2.msra.mxu0 0.0
    %1070 = vmatprep.subr.mxu0 0.0
    %1071 = vmatpush2.msra.mxu0 0.0
    %1072 = vmatprep.subr.mxu0 0.0
    %1073 = vmatpush2.msra.mxu0 0.0
    %1074 = vmatprep.subr.mxu0 0.0
    %1075 = vmatpush2.msra.mxu0 0.0
    %1076 = vmatprep.subr.mxu0 0.0
    %1077 = vmatpush2.msra.mxu0 0.0
    %1078 = vmatprep.subr.mxu0 0.0
    %1079 = vmatpush2.msra.mxu0 0.0
    %1080 = vmatprep.subr.mxu0 0.0
    %1081 = vmatpush2.msra.mxu0 0.0
    %1082 = vmatprep.subr.mxu0 0.0
    %1083 = vmatpush2.msra.mxu0 0.0
    %1084 = vmatprep.subr.mxu0 0.0
    %1085 = vmatpush2.msra.mxu0 0.0
    %1086 = vmatprep.subr.mxu0 0.0
    %1087 = vmatpush2.msra.mxu0 0.0
    %1088 = vmatprep.subr.mxu0 0.0
    %1089 = vmatpush2.msra.mxu0 0.0
    %1090 = vmatprep.subr.mxu0 0.0
    %1091 = vmatpush2.msra.mxu0 0.0
    %1092 = vmatprep.subr.mxu0 0.0
    %1093 = vmatpush2.msra.mxu0 0.0
    %1094 = vmatprep.subr.mxu0 0.0
    %1095 = vmatpush2.msra.mxu0 0.0
    %1096 = vmatprep.subr.mxu0 0.0
    %1097 = vmatpush2.msra.mxu0 0.0
    %1098 = vmatprep.mubr.f32.mxu0 0.0
    %1099 = vmatmul.mubr.f32.gmra.mxu0 %v198
    %v1100 = vpop.f32.mrf.mxu0
    %v1101 = vadd.f32 0.0, %v1100
    %v1102 = vpop.f32.mrf.mxu0
    %1103 = vmatprep.mubr.f32.mxu0 0.0
    %1104 = vmatmul.mubr.f32.gmra.mxu0 %v201
    %v1105 = vpop.f32.mrf.mxu0
    %v1106 = vadd.f32 0.0, %v1105
    %v1107 = vpop.f32.mrf.mxu0
    %1108 = vmatprep.mubr.f32.mxu0 0.0
    %1109 = vmatmul.mubr.f32.gmra.mxu0 %v204
    %v1110 = vpop.f32.mrf.mxu0
    %v1111 = vadd.f32 0.0, %v1110
    %v1112 = vpop.f32.mrf.mxu0
    %1113 = vdwg.mxu0
    %v1114 = vld [vmem:[%s2 + $0x120] sm:$0xff]
    %v1115 = vld [vmem:[%s2 + $0x128] sm:$0xff]
    %v1116 = vld [vmem:[%s2 + $0x130] sm:$0xff]
    %v1117 = vld [vmem:[%s2 + $0x138] sm:$0xff]
    %v1119 = vsel %vm113, %v1101, 0
    %1121 = vmatprep.subr.mxu0 0.0
    %1122 = vmatpush1.msra.mxu0 0.0
    %1123 = vmatprep.subr.mxu0 0.0
    %1124 = vmatpush1.msra.mxu0 0.0
    %1125 = vmatprep.subr.mxu0 0.0
    %1126 = vmatpush1.msra.mxu0 0.0
    %1127 = vmatprep.subr.mxu0 0.0
    %1128 = vmatpush1.msra.mxu0 0.0
    %1129 = vmatprep.subr.mxu0 0.0
    %1130 = vmatpush1.msra.mxu0 0.0
    %1131 = vmatprep.subr.mxu0 0.0
    %1132 = vmatpush1.msra.mxu0 0.0
    %1133 = vmatprep.subr.mxu0 0.0
    %1134 = vmatpush1.msra.mxu0 0.0
    %1135 = vmatprep.subr.mxu0 0.0
    %1136 = vmatpush1.msra.mxu0 0.0
    %1137 = vmatprep.subr.mxu0 0.0
    %1138 = vmatpush1.msra.mxu0 0.0
    %1139 = vmatprep.subr.mxu0 0.0
    %1140 = vmatpush1.msra.mxu0 0.0
    %1141 = vmatprep.subr.mxu0 0.0
    %1142 = vmatpush1.msra.mxu0 0.0
    %1143 = vmatprep.subr.mxu0 0.0
    %1144 = vmatpush1.msra.mxu0 0.0
    %1145 = vmatprep.subr.mxu0 0.0
    %1146 = vmatpush1.msra.mxu0 %v1117
    %1147 = vmatprep.subr.mxu0 0.0
    %1148 = vmatpush1.msra.mxu0 %v1116
    %1149 = vmatprep.subr.mxu0 0.0
    %1150 = vmatpush1.msra.mxu0 %v1115
    %1151 = vmatprep.subr.mxu0 0.0
    %1152 = vmatpush1.msra.mxu0 %v1114
    %1153 = vmatprep.subr.mxu0 0.0
    %1154 = vmatpush2.msra.mxu0 0.0
    %1155 = vmatprep.subr.mxu0 0.0
    %1156 = vmatpush2.msra.mxu0 0.0
    %1157 = vmatprep.subr.mxu0 0.0
    %1158 = vmatpush2.msra.mxu0 0.0
    %1159 = vmatprep.subr.mxu0 0.0
    %1160 = vmatpush2.msra.mxu0 0.0
    %1161 = vmatprep.subr.mxu0 0.0
    %1162 = vmatpush2.msra.mxu0 0.0
    %1163 = vmatprep.subr.mxu0 0.0
    %1164 = vmatpush2.msra.mxu0 0.0
    %1165 = vmatprep.subr.mxu0 0.0
    %1166 = vmatpush2.msra.mxu0 0.0
    %1167 = vmatprep.subr.mxu0 0.0
    %1168 = vmatpush2.msra.mxu0 0.0
    %1169 = vmatprep.subr.mxu0 0.0
    %1170 = vmatpush2.msra.mxu0 0.0
    %1171 = vmatprep.subr.mxu0 0.0
    %1172 = vmatpush2.msra.mxu0 0.0
    %1173 = vmatprep.subr.mxu0 0.0
    %1174 = vmatpush2.msra.mxu0 0.0
    %1175 = vmatprep.subr.mxu0 0.0
    %1176 = vmatpush2.msra.mxu0 0.0
    %1177 = vmatprep.subr.mxu0 0.0
    %1178 = vmatpush2.msra.mxu0 0.0
    %1179 = vmatprep.subr.mxu0 0.0
    %1180 = vmatpush2.msra.mxu0 0.0
    %1181 = vmatprep.subr.mxu0 0.0
    %1182 = vmatpush2.msra.mxu0 0.0
    %1183 = vmatprep.subr.mxu0 0.0
    %1184 = vmatpush2.msra.mxu0 0.0
    %1185 = vmatprep.mubr.f32.mxu0 0.0
    %1186 = vmatmul.mubr.f32.gmra.mxu0 %v1119
    %v1187 = vpop.f32.mrf.mxu0
    %v1188 = vadd.f32 0.0, %v1187
    %v1189 = vpop.f32.mrf.mxu0
    %1190 = vdwg.mxu0
    %v1191 = vadd.f32 %v942, %v1188
    %v1192 = vld [vmem:[%s2 + $0x140] sm:$0xff]
    %v1193 = vld [vmem:[%s2 + $0x148] sm:$0xff]
    %v1194 = vld [vmem:[%s2 + $0x150] sm:$0xff]
    %v1195 = vld [vmem:[%s2 + $0x158] sm:$0xff]
    %v1197 = vsel %vm113, %v1106, 0
    %1199 = vmatprep.subr.mxu0 0.0
    %1200 = vmatpush1.msra.mxu0 0.0
    %1201 = vmatprep.subr.mxu0 0.0
    %1202 = vmatpush1.msra.mxu0 0.0
    %1203 = vmatprep.subr.mxu0 0.0
    %1204 = vmatpush1.msra.mxu0 0.0
    %1205 = vmatprep.subr.mxu0 0.0
    %1206 = vmatpush1.msra.mxu0 0.0
    %1207 = vmatprep.subr.mxu0 0.0
    %1208 = vmatpush1.msra.mxu0 0.0
    %1209 = vmatprep.subr.mxu0 0.0
    %1210 = vmatpush1.msra.mxu0 0.0
    %1211 = vmatprep.subr.mxu0 0.0
    %1212 = vmatpush1.msra.mxu0 0.0
    %1213 = vmatprep.subr.mxu0 0.0
    %1214 = vmatpush1.msra.mxu0 0.0
    %1215 = vmatprep.subr.mxu0 0.0
    %1216 = vmatpush1.msra.mxu0 0.0
    %1217 = vmatprep.subr.mxu0 0.0
    %1218 = vmatpush1.msra.mxu0 0.0
    %1219 = vmatprep.subr.mxu0 0.0
    %1220 = vmatpush1.msra.mxu0 0.0
    %1221 = vmatprep.subr.mxu0 0.0
    %1222 = vmatpush1.msra.mxu0 0.0
    %1223 = vmatprep.subr.mxu0 0.0
    %1224 = vmatpush1.msra.mxu0 %v1195
    %1225 = vmatprep.subr.mxu0 0.0
    %1226 = vmatpush1.msra.mxu0 %v1194
    %1227 = vmatprep.subr.mxu0 0.0
    %1228 = vmatpush1.msra.mxu0 %v1193
    %1229 = vmatprep.subr.mxu0 0.0
    %1230 = vmatpush1.msra.mxu0 %v1192
    %1231 = vmatprep.subr.mxu0 0.0
    %1232 = vmatpush2.msra.mxu0 0.0
    %1233 = vmatprep.subr.mxu0 0.0
    %1234 = vmatpush2.msra.mxu0 0.0
    %1235 = vmatprep.subr.mxu0 0.0
    %1236 = vmatpush2.msra.mxu0 0.0
    %1237 = vmatprep.subr.mxu0 0.0
    %1238 = vmatpush2.msra.mxu0 0.0
    %1239 = vmatprep.subr.mxu0 0.0
    %1240 = vmatpush2.msra.mxu0 0.0
    %1241 = vmatprep.subr.mxu0 0.0
    %1242 = vmatpush2.msra.mxu0 0.0
    %1243 = vmatprep.subr.mxu0 0.0
    %1244 = vmatpush2.msra.mxu0 0.0
    %1245 = vmatprep.subr.mxu0 0.0
    %1246 = vmatpush2.msra.mxu0 0.0
    %1247 = vmatprep.subr.mxu0 0.0
    %1248 = vmatpush2.msra.mxu0 0.0
    %1249 = vmatprep.subr.mxu0 0.0
    %1250 = vmatpush2.msra.mxu0 0.0
    %1251 = vmatprep.subr.mxu0 0.0
    %1252 = vmatpush2.msra.mxu0 0.0
    %1253 = vmatprep.subr.mxu0 0.0
    %1254 = vmatpush2.msra.mxu0 0.0
    %1255 = vmatprep.subr.mxu0 0.0
    %1256 = vmatpush2.msra.mxu0 0.0
    %1257 = vmatprep.subr.mxu0 0.0
    %1258 = vmatpush2.msra.mxu0 0.0
    %1259 = vmatprep.subr.mxu0 0.0
    %1260 = vmatpush2.msra.mxu0 0.0
    %1261 = vmatprep.subr.mxu0 0.0
    %1262 = vmatpush2.msra.mxu0 0.0
    %1263 = vmatprep.mubr.f32.mxu0 0.0
    %1264 = vmatmul.mubr.f32.gmra.mxu0 %v1197
    %v1265 = vpop.f32.mrf.mxu0
    %v1266 = vadd.f32 0.0, %v1265
    %v1267 = vpop.f32.mrf.mxu0
    %1268 = vdwg.mxu0
    %v1269 = vadd.f32 %v1191, %v1266
    %v1270 = vld [vmem:[%s2 + $0x160] sm:$0xff]
    %v1271 = vld [vmem:[%s2 + $0x168] sm:$0xff]
    %v1272 = vld [vmem:[%s2 + $0x170] sm:$0xff]
    %v1273 = vld [vmem:[%s2 + $0x178] sm:$0xff]
    %v1275 = vsel %vm113, %v1111, 0
    %1277 = vmatprep.subr.mxu0 0.0
    %1278 = vmatpush1.msra.mxu0 0.0
    %1279 = vmatprep.subr.mxu0 0.0
    %1280 = vmatpush1.msra.mxu0 0.0
    %1281 = vmatprep.subr.mxu0 0.0
    %1282 = vmatpush1.msra.mxu0 0.0
    %1283 = vmatprep.subr.mxu0 0.0
    %1284 = vmatpush1.msra.mxu0 0.0
    %1285 = vmatprep.subr.mxu0 0.0
    %1286 = vmatpush1.msra.mxu0 0.0
    %1287 = vmatprep.subr.mxu0 0.0
    %1288 = vmatpush1.msra.mxu0 0.0
    %1289 = vmatprep.subr.mxu0 0.0
    %1290 = vmatpush1.msra.mxu0 0.0
    %1291 = vmatprep.subr.mxu0 0.0
    %1292 = vmatpush1.msra.mxu0 0.0
    %1293 = vmatprep.subr.mxu0 0.0
    %1294 = vmatpush1.msra.mxu0 0.0
    %1295 = vmatprep.subr.mxu0 0.0
    %1296 = vmatpush1.msra.mxu0 0.0
    %1297 = vmatprep.subr.mxu0 0.0
    %1298 = vmatpush1.msra.mxu0 0.0
    %1299 = vmatprep.subr.mxu0 0.0
    %1300 = vmatpush1.msra.mxu0 0.0
    %1301 = vmatprep.subr.mxu0 0.0
    %1302 = vmatpush1.msra.mxu0 %v1273
    %1303 = vmatprep.subr.mxu0 0.0
    %1304 = vmatpush1.msra.mxu0 %v1272
    %1305 = vmatprep.subr.mxu0 0.0
    %1306 = vmatpush1.msra.mxu0 %v1271
    %1307 = vmatprep.subr.mxu0 0.0
    %1308 = vmatpush1.msra.mxu0 %v1270
    %1309 = vmatprep.subr.mxu0 0.0
    %1310 = vmatpush2.msra.mxu0 0.0
    %1311 = vmatprep.subr.mxu0 0.0
    %1312 = vmatpush2.msra.mxu0 0.0
    %1313 = vmatprep.subr.mxu0 0.0
    %1314 = vmatpush2.msra.mxu0 0.0
    %1315 = vmatprep.subr.mxu0 0.0
    %1316 = vmatpush2.msra.mxu0 0.0
    %1317 = vmatprep.subr.mxu0 0.0
    %1318 = vmatpush2.msra.mxu0 0.0
    %1319 = vmatprep.subr.mxu0 0.0
    %1320 = vmatpush2.msra.mxu0 0.0
    %1321 = vmatprep.subr.mxu0 0.0
    %1322 = vmatpush2.msra.mxu0 0.0
    %1323 = vmatprep.subr.mxu0 0.0
    %1324 = vmatpush2.msra.mxu0 0.0
    %1325 = vmatprep.subr.mxu0 0.0
    %1326 = vmatpush2.msra.mxu0 0.0
    %1327 = vmatprep.subr.mxu0 0.0
    %1328 = vmatpush2.msra.mxu0 0.0
    %1329 = vmatprep.subr.mxu0 0.0
    %1330 = vmatpush2.msra.mxu0 0.0
    %1331 = vmatprep.subr.mxu0 0.0
    %1332 = vmatpush2.msra.mxu0 0.0
    %1333 = vmatprep.subr.mxu0 0.0
    %1334 = vmatpush2.msra.mxu0 0.0
    %1335 = vmatprep.subr.mxu0 0.0
    %1336 = vmatpush2.msra.mxu0 0.0
    %1337 = vmatprep.subr.mxu0 0.0
    %1338 = vmatpush2.msra.mxu0 0.0
    %1339 = vmatprep.subr.mxu0 0.0
    %1340 = vmatpush2.msra.mxu0 0.0
    %1341 = vmatprep.mubr.f32.mxu0 0.0
    %1342 = vmatmul.mubr.f32.gmra.mxu0 %v1275
    %v1343 = vpop.f32.mrf.mxu0
    %v1344 = vadd.f32 0.0, %v1343
    %v1345 = vpop.f32.mrf.mxu0
    %1346 = vdwg.mxu0
    %v1347 = vadd.f32 %v1269, %v1344
    %v1348 = vlaneseq
    %v1349 = vshrl.u32 %v1348, 7
    %v1350 = vsub.s32 3, %v1349
    %v1351 = vrot.slane %v20, %v1350
    %v1352 = vadd.f32 %v1347, %v1351
    %v1353 = vmax.f32 %v1352, 0.0
    %v1354 = vld [vmem:[%s2 + $0x180] sm:$0xff]
    %v1355 = vld [vmem:[%s2 + $0x188] sm:$0xff]
    %v1356 = vld [vmem:[%s2 + $0x190] sm:$0xff]
    %v1357 = vld [vmem:[%s2 + $0x198] sm:$0xff]
    %v1358 = vlaneseq
    %v1359 = vshrl.u32 %v1358, 7
    %v1360 = vsub.s32 4, %v1359
    %v1361 = vrot.slane %v20, %v1360
    %v1363 = vsel %vm113, %v1353, 0
    %1365 = vmatprep.subr.mxu0 0.0
    %1366 = vmatpush1.msra.mxu0 0.0
    %1367 = vmatprep.subr.mxu0 0.0
    %1368 = vmatpush1.msra.mxu0 0.0
    %1369 = vmatprep.subr.mxu0 0.0
    %1370 = vmatpush1.msra.mxu0 0.0
    %1371 = vmatprep.subr.mxu0 0.0
    %1372 = vmatpush1.msra.mxu0 0.0
    %1373 = vmatprep.subr.mxu0 0.0
    %1374 = vmatpush1.msra.mxu0 0.0
    %1375 = vmatprep.subr.mxu0 0.0
    %1376 = vmatpush1.msra.mxu0 0.0
    %1377 = vmatprep.subr.mxu0 0.0
    %1378 = vmatpush1.msra.mxu0 0.0
    %1379 = vmatprep.subr.mxu0 0.0
    %1380 = vmatpush1.msra.mxu0 0.0
    %1381 = vmatprep.subr.mxu0 0.0
    %1382 = vmatpush1.msra.mxu0 0.0
    %1383 = vmatprep.subr.mxu0 0.0
    %1384 = vmatpush1.msra.mxu0 0.0
    %1385 = vmatprep.subr.mxu0 0.0
    %1386 = vmatpush1.msra.mxu0 0.0
    %1387 = vmatprep.subr.mxu0 0.0
    %1388 = vmatpush1.msra.mxu0 0.0
    %1389 = vmatprep.subr.mxu0 0.0
    %1390 = vmatpush1.msra.mxu0 %v1357
    %1391 = vmatprep.subr.mxu0 0.0
    %1392 = vmatpush1.msra.mxu0 %v1356
    %1393 = vmatprep.subr.mxu0 0.0
    %1394 = vmatpush1.msra.mxu0 %v1355
    %1395 = vmatprep.subr.mxu0 0.0
    %1396 = vmatpush1.msra.mxu0 %v1354
    %1397 = vmatprep.subr.mxu0 0.0
    %1398 = vmatpush2.msra.mxu0 0.0
    %1399 = vmatprep.subr.mxu0 0.0
    %1400 = vmatpush2.msra.mxu0 0.0
    %1401 = vmatprep.subr.mxu0 0.0
    %1402 = vmatpush2.msra.mxu0 0.0
    %1403 = vmatprep.subr.mxu0 0.0
    %1404 = vmatpush2.msra.mxu0 0.0
    %1405 = vmatprep.subr.mxu0 0.0
    %1406 = vmatpush2.msra.mxu0 0.0
    %1407 = vmatprep.subr.mxu0 0.0
    %1408 = vmatpush2.msra.mxu0 0.0
    %1409 = vmatprep.subr.mxu0 0.0
    %1410 = vmatpush2.msra.mxu0 0.0
    %1411 = vmatprep.subr.mxu0 0.0
    %1412 = vmatpush2.msra.mxu0 0.0
    %1413 = vmatprep.subr.mxu0 0.0
    %1414 = vmatpush2.msra.mxu0 0.0
    %1415 = vmatprep.subr.mxu0 0.0
    %1416 = vmatpush2.msra.mxu0 0.0
    %1417 = vmatprep.subr.mxu0 0.0
    %1418 = vmatpush2.msra.mxu0 0.0
    %1419 = vmatprep.subr.mxu0 0.0
    %1420 = vmatpush2.msra.mxu0 0.0
    %1421 = vmatprep.subr.mxu0 0.0
    %1422 = vmatpush2.msra.mxu0 0.0
    %1423 = vmatprep.subr.mxu0 0.0
    %1424 = vmatpush2.msra.mxu0 0.0
    %1425 = vmatprep.subr.mxu0 0.0
    %1426 = vmatpush2.msra.mxu0 0.0
    %1427 = vmatprep.subr.mxu0 0.0
    %1428 = vmatpush2.msra.mxu0 0.0
    %1429 = vmatprep.mubr.f32.mxu0 0.0
    %1430 = vmatmul.mubr.f32.gmra.mxu0 %v1363
    %v1431 = vpop.f32.mrf.mxu0
    %v1432 = vadd.f32 %v1361, %v1431
    %v1433 = vpop.f32.mrf.mxu0
    %1434 = vdwg.mxu0
    %v1435 = vmax.f32 %v1432, 0.0
    %v1436 = vld [vmem:[%s2 + $0x1a0] sm:$0xff]
    %v1437 = vld [vmem:[%s2 + $0x1a8] sm:$0xff]
    %v1438 = vld [vmem:[%s2 + $0x1b0] sm:$0xff]
    %v1439 = vld [vmem:[%s2 + $0x1b8] sm:$0xff]
    %v1440 = vlaneseq
    %v1441 = vshrl.u32 %v1440, 7
    %v1442 = vsub.s32 5, %v1441
    %v1443 = vrot.slane %v20, %v1442
    %v1445 = vsel %vm113, %v1435, 0
    %1447 = vmatprep.subr.mxu0 0.0
    %1448 = vmatpush1.msra.mxu0 0.0
    %1449 = vmatprep.subr.mxu0 0.0
    %1450 = vmatpush1.msra.mxu0 0.0
    %1451 = vmatprep.subr.mxu0 0.0
    %1452 = vmatpush1.msra.mxu0 0.0
    %1453 = vmatprep.subr.mxu0 0.0
    %1454 = vmatpush1.msra.mxu0 0.0
    %1455 = vmatprep.subr.mxu0 0.0
    %1456 = vmatpush1.msra.mxu0 0.0
    %1457 = vmatprep.subr.mxu0 0.0
    %1458 = vmatpush1.msra.mxu0 0.0
    %1459 = vmatprep.subr.mxu0 0.0
    %1460 = vmatpush1.msra.mxu0 0.0
    %1461 = vmatprep.subr.mxu0 0.0
    %1462 = vmatpush1.msra.mxu0 0.0
    %1463 = vmatprep.subr.mxu0 0.0
    %1464 = vmatpush1.msra.mxu0 0.0
    %1465 = vmatprep.subr.mxu0 0.0
    %1466 = vmatpush1.msra.mxu0 0.0
    %1467 = vmatprep.subr.mxu0 0.0
    %1468 = vmatpush1.msra.mxu0 0.0
    %1469 = vmatprep.subr.mxu0 0.0
    %1470 = vmatpush1.msra.mxu0 0.0
    %1471 = vmatprep.subr.mxu0 0.0
    %1472 = vmatpush1.msra.mxu0 %v1439
    %1473 = vmatprep.subr.mxu0 0.0
    %1474 = vmatpush1.msra.mxu0 %v1438
    %1475 = vmatprep.subr.mxu0 0.0
    %1476 = vmatpush1.msra.mxu0 %v1437
    %1477 = vmatprep.subr.mxu0 0.0
    %1478 = vmatpush1.msra.mxu0 %v1436
    %1479 = vmatprep.subr.mxu0 0.0
    %1480 = vmatpush2.msra.mxu0 0.0
    %1481 = vmatprep.subr.mxu0 0.0
    %1482 = vmatpush2.msra.mxu0 0.0
    %1483 = vmatprep.subr.mxu0 0.0
    %1484 = vmatpush2.msra.mxu0 0.0
    %1485 = vmatprep.subr.mxu0 0.0
    %1486 = vmatpush2.msra.mxu0 0.0
    %1487 = vmatprep.subr.mxu0 0.0
    %1488 = vmatpush2.msra.mxu0 0.0
    %1489 = vmatprep.subr.mxu0 0.0
    %1490 = vmatpush2.msra.mxu0 0.0
    %1491 = vmatprep.subr.mxu0 0.0
    %1492 = vmatpush2.msra.mxu0 0.0
    %1493 = vmatprep.subr.mxu0 0.0
    %1494 = vmatpush2.msra.mxu0 0.0
    %1495 = vmatprep.subr.mxu0 0.0
    %1496 = vmatpush2.msra.mxu0 0.0
    %1497 = vmatprep.subr.mxu0 0.0
    %1498 = vmatpush2.msra.mxu0 0.0
    %1499 = vmatprep.subr.mxu0 0.0
    %1500 = vmatpush2.msra.mxu0 0.0
    %1501 = vmatprep.subr.mxu0 0.0
    %1502 = vmatpush2.msra.mxu0 0.0
    %1503 = vmatprep.subr.mxu0 0.0
    %1504 = vmatpush2.msra.mxu0 0.0
    %1505 = vmatprep.subr.mxu0 0.0
    %1506 = vmatpush2.msra.mxu0 0.0
    %1507 = vmatprep.subr.mxu0 0.0
    %1508 = vmatpush2.msra.mxu0 0.0
    %1509 = vmatprep.subr.mxu0 0.0
    %1510 = vmatpush2.msra.mxu0 0.0
    %1511 = vmatprep.mubr.f32.mxu0 0.0
    %1512 = vmatmul.mubr.f32.gmra.mxu0 %v1445
    %v1513 = vpop.f32.mrf.mxu0
    %v1514 = vadd.f32 %v1443, %v1513
    %v1515 = vpop.f32.mrf.mxu0
    %1516 = vdwg.mxu0
    %v1517 = vsel %vm113, %v1514, -inf
    %1518 = vmax.xlane.f32.xlu0 %v1517
    %v1519 = vpop.xlane.xlu0 %1518
    %v1520 = vsub.f32 %v1514, %v1519
    %v1521 = vmul.f32 %v1520, 1.442695
    %v1522 = vpow.pop %v1521
    %v1523 = vsel %vm113, %v1522, 0.0
    %1524 = vadd.xlane.f32.xlu0 %v1523
    %v1525 = vpop.xlane.xlu0 %1524
    %v1526 = vlog2.pop %v1525
    %v1527 = vmul.f32 %v1526, 0.6931472
    %v1528 = vadd.f32 %v1519, %v1527
    %v1529 = vsub.f32 %v1514, %v1528
    %v1530 = vsel %vm113, %v1529, 0.0
    %1531 = vst [vmem:[#allocation2] sm:$0xff] %v1530
    // Predicated region
    $region14: #{tpu_custom_call.1} parent=1 // pred_check
      _
    $region15: #{tpu_custom_call.1} parent=1 // pred_check_branch
      %1533 = sbr.rel (0) target = $region17
    $region16: #{tpu_custom_call.1} parent=1 // pred_region
      %s1535 = ssub.s32 128, 128
      %1536 = vsyncadd [#allocation3], %s1535
      %s1538 = sshll.u32 [#allocation2], 4
      %s1539 = int_to_ptr.vmem [resolvable:$true] %s1538
      %1541 = dma.vmem_to_hbm [thread:$0]  %s1539, 128, %s3, [#allocation3]
    $region17: #{tpu_custom_call.1} parent=1 // pred_fallthru
      _
    // Predicated region
    $region18: #{tpu_custom_call.1} parent=1 // pred_check
      _
    $region19: #{tpu_custom_call.1} parent=1 // pred_check_branch
      %1543 = sbr.rel (0) target = $region21
    $region20: #{tpu_custom_call.1} parent=1 // pred_region
      %1544 = dma.done [#allocation3], 128
    $region21: #{tpu_custom_call.1} parent=1 // pred_fallthru
      _
    %1545 = vsyncpa [#allocation3], 1

</llo_original>
